<compile_context>
chip_gen: v6e
topology: v6e:2x2x1
jax: 0.10.0
libtpu: 0.0.40
codegen_flags: <defaults>
</compile_context>

<pallas_src>
import jax
import jax.numpy as jnp
from jax import lax
from jax.experimental import pallas as pl
from jax.experimental.pallas import tpu as pltpu


_TAPS = tuple((dy, dx) for dy in (-1, 0, 1) for dx in (-1, 0, 1))  # t = (dy+1)*3 + (dx+1)


def _make_kernel(W, L, Cin, Cp, Cout):
    """W: image width, L: lanes per block (= B*HW), channel counts as named."""

    def _shift(t):
        dy, dx = _TAPS[t]
        return (-(dy * W + dx)) % L

    def kernel(x_ref, mask_ref, wp1_ref, bp1_ref, wc1_ref, bc1_ref,
               wp2_ref, bp2_ref, wc2_ref, bc2_ref, out_ref):
        x = x_ref[0]                                   # (Cin, L), compute dtype, lane-dense
        cdt = x.dtype

        def shifted(a, t):
            """a shifted by tap (dy, dx), zero outside each image. XLU roll + precomputed mask."""
            sh = _shift(t)
            s = pltpu.roll(a, sh, 1) if sh != 0 else a
            if t == 4:                                  # center tap: no boundary clipping
                return s
            return s * mask_ref[t:t + 1, :]             # (1, L) resident mask row

        def primary(col, wp_ref, bp_ref):
            y = jnp.dot(wp_ref[...], col, preferred_element_type=jnp.float32)
            return (y + bp_ref[...]).astype(cdt)         # (Cp, L)

        def cheap_op(x1, wc_ref, bc_ref):
            """3x3 depthwise conv on x1. Returns (x2, shifted-slab list for reuse)."""
            wc = wc_ref[...]                             # (Cp, 9), hoisted load
            s = [shifted(x1, t) for t in range(9)]
            # three independent accumulation chains -> better VALU ILP than one serial chain
            a0 = wc[:, 0:1] * s[0] + wc[:, 1:2] * s[1] + wc[:, 2:3] * s[2]
            a1 = wc[:, 3:4] * s[3] + wc[:, 4:5] * s[4] + wc[:, 5:6] * s[5]
            a2 = wc[:, 6:7] * s[6] + wc[:, 7:8] * s[7] + wc[:, 8:9] * s[8]
            x2 = a0 + a1 + (a2 + bc_ref[...])
            return x2, s

        # -------- stage 1: h = relu(ghost1(x)), kept on-chip --------
        col1 = jnp.concatenate([shifted(x, t) for t in range(9)], axis=0)   # (9*Cin, L)
        x1a = primary(col1, wp1_ref, bp1_ref)                               # (Cp, L)
        x2a, s1a = cheap_op(x1a, wc1_ref, bc1_ref)                          # (Cp, L), 9 slabs
        relu_x2a = jnp.maximum(x2a, 0)

        # -------- stage 2 im2col: reuse stage-1 shifted slabs for the x1-half --------
        # relu and the 0/1 boundary mask commute with roll:
        #   shifted(relu(x1a), t) == relu(shifted(x1a, t)) == relu(s1a[t])
        col2 = jnp.concatenate(
            [jnp.concatenate([jnp.maximum(s1a[t], 0), shifted(relu_x2a, t)], axis=0)
             for t in range(9)], axis=0)                                     # (9*Cout, L)
        x1b = primary(col2, wp2_ref, bp2_ref)                                # (Cp, L)
        x2b, _ = cheap_op(x1b, wc2_ref, bc2_ref)                             # (Cp, L)

        # -------- residual + relu, ONE lane/sublane-dense store --------
        out = jnp.concatenate(
            [jnp.maximum(x1b + x[0:Cp, :], 0),
             jnp.maximum(x2b + x[Cp:Cout, :], 0)], axis=0)                   # (Cout, L)
        out_ref[0] = out.astype(out_ref.dtype)

    return kernel


def basic_block_forward(x, params, stride=1, downsample=None, *,
                        compute_dtype=jnp.float32, images_per_block=None,
                        vmem_limit_bytes=None):
    """BasicBlock forward. x: NCHW float32. Requires stride=1, downsample=None (inplanes==planes).

    compute_dtype: jnp.bfloat16 recommended on v6e/v7x (halves VPU/XLU traffic & VMEM footprint);
                   keep jnp.float32 on v5e.
    images_per_block: images folded into one grid step (lanes = images_per_block*H*W).
                      None -> smallest fold making the lane dim a multiple of 128.
    """
    assert stride == 1 and downsample is None
    N, Cin, H, W = x.shape
    Cp = params["wp1"].shape[-1]
    Cout = 2 * Cp                       # GhostModule ratio-2 assumption
    assert Cin == Cout, "residual path requires inplanes == planes (ratio-2 ghost)"
    HW = H * W

    # ---- choose how many images to fold into the lane axis of one grid step ----
    if images_per_block is None:
        images_per_block = N
        for b in range(1, N + 1):
            if N % b == 0 and (b * HW) % 128 == 0:
                images_per_block = b
                break
    B = images_per_block
    assert N % B == 0
    G = N // B
    L = B * HW
    cdt = compute_dtype

    # lane-dense (C, B*HW) slab per grid step: lane = b_local*HW + h*W + w  (layout plumbing only)
    x_blocks = jnp.transpose(x.reshape(G, B, Cin, HW), (0, 2, 1, 3)).reshape(G, Cin, L).astype(cdt)

    # ---- 9 SAME-padding boundary masks, precomputed once (resident constant input) ----
    hw = jnp.arange(HW, dtype=jnp.int32)
    hh, ww = hw // W, hw % W

    def tap_mask(dy, dx):
        m = jnp.ones((HW,), jnp.bool_)
        if dy == -1:
            m &= hh >= 1
        if dy == 1:
            m &= hh < H - 1
        if dx == -1:
            m &= ww >= 1
        if dx == 1:
            m &= ww < W - 1
        return m

    masks = jnp.stack([tap_mask(dy, dx) for dy, dx in _TAPS]).astype(cdt)   # (9, HW)
    masks = jnp.tile(masks, (1, B))                                         # (9, L)

    def pack_primary(wp):               # (3,3,cin,Cp) HWIO -> (Cp, 9*cin), tap-major / cin-minor
        cin = wp.shape[2]
        return jnp.transpose(wp, (3, 0, 1, 2)).reshape(Cp, 9 * cin).astype(cdt)

    def pack_cheap(wc):                 # (3,3,1,Cp) -> (Cp, 9)
        return jnp.transpose(wc.reshape(9, Cp), (1, 0)).astype(cdt)

    args = (
        x_blocks, masks,
        pack_primary(params["wp1"]), params["bp1"].reshape(Cp, 1).astype(cdt),
        pack_cheap(params["wc1"]),   params["bc1"].reshape(Cp, 1).astype(cdt),
        pack_primary(params["wp2"]), params["bp2"].reshape(Cp, 1).astype(cdt),
        pack_cheap(params["wc2"]),   params["bc2"].reshape(Cp, 1).astype(cdt),
    )

    def const_spec(a):                  # resident across the whole grid (constant index_map)
        nd = a.ndim
        return pl.BlockSpec(tuple(a.shape), lambda g, _nd=nd: (0,) * _nd)

    in_specs = [pl.BlockSpec((1, Cin, L), lambda g: (g, 0, 0))] + [const_spec(a) for a in args[1:]]

    cp_kwargs = dict(dimension_semantics=("parallel",))   # batch-block axis feeds both v7x TCs
    if vmem_limit_bytes is not None:
        cp_kwargs["vmem_limit_bytes"] = vmem_limit_bytes

    out_flat = pl.pallas_call(
        _make_kernel(W, L, Cin, Cp, Cout),
        out_shape=jax.ShapeDtypeStruct((G, Cout, L), x.dtype),
        grid=(G,),
        in_specs=in_specs,
        out_specs=pl.BlockSpec((1, Cout, L), lambda g: (g, 0, 0)),
        compiler_params=pltpu.CompilerParams(**cp_kwargs),
    )(*args)

    return jnp.transpose(out_flat.reshape(G, Cout, B, HW), (0, 2, 1, 3)).reshape(N, Cout, H, W)


# ---------------- pure-JAX reference for verification ----------------
def _ghost_ref(x, wp, bp, wc, bc):
    Cp = wp.shape[-1]
    dn = ("NCHW", "HWIO", "NCHW")
    x1 = lax.conv_general_dilated(x, wp, (1, 1), "SAME",
                                  dimension_numbers=dn) + bp.reshape(1, Cp, 1, 1)
    x2 = lax.conv_general_dilated(x1, wc, (1, 1), "SAME", dimension_numbers=dn,
                                  feature_group_count=Cp) + bc.reshape(1, Cp, 1, 1)
    return jnp.concatenate([x1, x2], axis=1)


def basic_block_ref(x, p):
    h = jax.nn.relu(_ghost_ref(x, p["wp1"], p["bp1"], p["wc1"], p["bc1"]))
    return jax.nn.relu(_ghost_ref(h, p["wp2"], p["bp2"], p["wc2"], p["bc2"]) + x)


if __name__ == "__main__":
    key = jax.random.PRNGKey(0)
    N, H, W = 2, 16, 16
    inplanes = planes = 8               # residual path requires inplanes == planes
    Cp = planes // 2                    # ghost primary-branch channels (ratio=2)

    ks = jax.random.split(key, 9)
    x = jax.random.normal(ks[0], (N, inplanes, H, W), jnp.float32)
    params = {
        "wp1": 0.2 * jax.random.normal(ks[1], (3, 3, inplanes, Cp), jnp.float32),
        "bp1": 0.1 * jax.random.normal(ks[2], (Cp,), jnp.float32),
        "wc1": 0.2 * jax.random.normal(ks[3], (3, 3, 1, Cp), jnp.float32),
        "bc1": 0.1 * jax.random.normal(ks[4], (Cp,), jnp.float32),
        "wp2": 0.2 * jax.random.normal(ks[5], (3, 3, planes, Cp), jnp.float32),
        "bp2": 0.1 * jax.random.normal(ks[6], (Cp,), jnp.float32),
        "wc2": 0.2 * jax.random.normal(ks[7], (3, 3, 1, Cp), jnp.float32),
        "bc2": 0.1 * jax.random.normal(ks[8], (Cp,), jnp.float32),
    }

    ref = jax.block_until_ready(basic_block_ref(x, params))

    # f32, auto fold (B=1 here since HW=256 is a multiple of 128) -> grid=(2,), 2 parallel steps
    out = jax.block_until_ready(basic_block_forward(x, params))
    assert out.shape == (N, planes, H, W)
    err = jnp.max(jnp.abs(out - ref))
    assert jnp.allclose(out, ref, atol=1e-4, rtol=1e-4), f"max abs err {err}"

    # f32, explicit batch folding (both images in one grid step, lanes = 512)
    out_fold = jax.block_until_ready(basic_block_forward(x, params, images_per_block=2))
    err_fold = jnp.max(jnp.abs(out_fold - ref))
    assert jnp.allclose(out_fold, ref, atol=1e-4, rtol=1e-4), f"fold max abs err {err_fold}"

    # bf16 compute path (v6e / v7x recommendation) -- loose check vs f32 reference
    out_bf16 = jax.block_until_ready(
        basic_block_forward(x, params, compute_dtype=jnp.bfloat16))
    rel = jnp.max(jnp.abs(out_bf16 - ref)) / jnp.max(jnp.abs(ref))
    assert bool(rel < 0.1), f"bf16 relative-to-max err {rel}"

    print("KERNEL_OK")
</pallas_src>

<mosaic_0001>
module attributes {stable_mosaic.version = 11 : i64} {
  func.func @kernel(%arg0: i32, %arg1: memref<1x8x256xf32, #tpu.memory_space<vmem>>, %arg2: memref<9x256xf32, #tpu.memory_space<vmem>>, %arg3: memref<4x72xf32, #tpu.memory_space<vmem>>, %arg4: memref<4x1xf32, #tpu.memory_space<vmem>>, %arg5: memref<4x9xf32, #tpu.memory_space<vmem>>, %arg6: memref<4x1xf32, #tpu.memory_space<vmem>>, %arg7: memref<4x72xf32, #tpu.memory_space<vmem>>, %arg8: memref<4x1xf32, #tpu.memory_space<vmem>>, %arg9: memref<4x9xf32, #tpu.memory_space<vmem>>, %arg10: memref<4x1xf32, #tpu.memory_space<vmem>>, %arg11: memref<1x8x256xf32, #tpu.memory_space<vmem>>) attributes {dimension_semantics = [#tpu.dimension_semantics<parallel>], iteration_bounds = array<i64: 2>, scalar_prefetch = 0 : i64, scratch_operands = 0 : i64, tpu.core_type = #tpu.core_type<tc>, window_params = [{transform_indices = @transform_0, window_bounds = array<i64: 1, 8, 256>}, {pipeline_mode = #tpu.pipeline_mode<synchronous>, transform_indices = @transform_1, window_bounds = array<i64: 9, 256>}, {pipeline_mode = #tpu.pipeline_mode<synchronous>, transform_indices = @transform_2, window_bounds = array<i64: 4, 72>}, {pipeline_mode = #tpu.pipeline_mode<synchronous>, transform_indices = @transform_3, window_bounds = array<i64: 4, 1>}, {pipeline_mode = #tpu.pipeline_mode<synchronous>, transform_indices = @transform_4, window_bounds = array<i64: 4, 9>}, {pipeline_mode = #tpu.pipeline_mode<synchronous>, transform_indices = @transform_5, window_bounds = array<i64: 4, 1>}, {pipeline_mode = #tpu.pipeline_mode<synchronous>, transform_indices = @transform_6, window_bounds = array<i64: 4, 72>}, {pipeline_mode = #tpu.pipeline_mode<synchronous>, transform_indices = @transform_7, window_bounds = array<i64: 4, 1>}, {pipeline_mode = #tpu.pipeline_mode<synchronous>, transform_indices = @transform_8, window_bounds = array<i64: 4, 9>}, {pipeline_mode = #tpu.pipeline_mode<synchronous>, transform_indices = @transform_9, window_bounds = array<i64: 4, 1>}, {transform_indices = @transform_10, window_bounds = array<i64: 1, 8, 256>}]} {
    %c0 = arith.constant 0 : index
    %c0_0 = arith.constant 0 : index
    %c0_1 = arith.constant 0 : index
    %0 = vector.load %arg1[%c0, %c0_0, %c0_1] : memref<1x8x256xf32, #tpu.memory_space<vmem>>, vector<1x8x256xf32>
    %1 = vector.shape_cast %0 : vector<1x8x256xf32> to vector<8x256xf32>
    %c17_i32 = arith.constant 17 : i32
    %2 = tpu.dynamic_rotate %1 by %c17_i32 dim 1 : vector<8x256xf32>, i32 -> vector<8x256xf32>
    %c0_2 = arith.constant 0 : index
    %c0_3 = arith.constant 0 : index
    %3 = vector.load %arg2[%c0_2, %c0_3] : memref<9x256xf32, #tpu.memory_space<vmem>>, vector<1x256xf32>
    %4 = vector.broadcast %3 : vector<1x256xf32> to vector<8x256xf32>
    %5 = arith.mulf %2, %4 : vector<8x256xf32>
    %c16_i32 = arith.constant 16 : i32
    %6 = tpu.dynamic_rotate %1 by %c16_i32 dim 1 : vector<8x256xf32>, i32 -> vector<8x256xf32>
    %c1 = arith.constant 1 : index
    %c0_4 = arith.constant 0 : index
    %7 = vector.load %arg2[%c1, %c0_4] : memref<9x256xf32, #tpu.memory_space<vmem>>, vector<1x256xf32>
    %8 = vector.broadcast %7 : vector<1x256xf32> to vector<8x256xf32>
    %9 = arith.mulf %6, %8 : vector<8x256xf32>
    %c15_i32 = arith.constant 15 : i32
    %10 = tpu.dynamic_rotate %1 by %c15_i32 dim 1 : vector<8x256xf32>, i32 -> vector<8x256xf32>
    %c2 = arith.constant 2 : index
    %c0_5 = arith.constant 0 : index
    %11 = vector.load %arg2[%c2, %c0_5] : memref<9x256xf32, #tpu.memory_space<vmem>>, vector<1x256xf32>
    %12 = vector.broadcast %11 : vector<1x256xf32> to vector<8x256xf32>
    %13 = arith.mulf %10, %12 : vector<8x256xf32>
    %c1_i32 = arith.constant 1 : i32
    %14 = tpu.dynamic_rotate %1 by %c1_i32 dim 1 : vector<8x256xf32>, i32 -> vector<8x256xf32>
    %c3 = arith.constant 3 : index
    %c0_6 = arith.constant 0 : index
    %15 = vector.load %arg2[%c3, %c0_6] : memref<9x256xf32, #tpu.memory_space<vmem>>, vector<1x256xf32>
    %16 = vector.broadcast %15 : vector<1x256xf32> to vector<8x256xf32>
    %17 = arith.mulf %14, %16 : vector<8x256xf32>
    %c255_i32 = arith.constant 255 : i32
    %18 = tpu.dynamic_rotate %1 by %c255_i32 dim 1 : vector<8x256xf32>, i32 -> vector<8x256xf32>
    %c5 = arith.constant 5 : index
    %c0_7 = arith.constant 0 : index
    %19 = vector.load %arg2[%c5, %c0_7] : memref<9x256xf32, #tpu.memory_space<vmem>>, vector<1x256xf32>
    %20 = vector.broadcast %19 : vector<1x256xf32> to vector<8x256xf32>
    %21 = arith.mulf %18, %20 : vector<8x256xf32>
    %c241_i32 = arith.constant 241 : i32
    %22 = tpu.dynamic_rotate %1 by %c241_i32 dim 1 : vector<8x256xf32>, i32 -> vector<8x256xf32>
    %c6 = arith.constant 6 : index
    %c0_8 = arith.constant 0 : index
    %23 = vector.load %arg2[%c6, %c0_8] : memref<9x256xf32, #tpu.memory_space<vmem>>, vector<1x256xf32>
    %24 = vector.broadcast %23 : vector<1x256xf32> to vector<8x256xf32>
    %25 = arith.mulf %22, %24 : vector<8x256xf32>
    %c240_i32 = arith.constant 240 : i32
    %26 = tpu.dynamic_rotate %1 by %c240_i32 dim 1 : vector<8x256xf32>, i32 -> vector<8x256xf32>
    %c7 = arith.constant 7 : index
    %c0_9 = arith.constant 0 : index
    %27 = vector.load %arg2[%c7, %c0_9] : memref<9x256xf32, #tpu.memory_space<vmem>>, vector<1x256xf32>
    %28 = vector.broadcast %27 : vector<1x256xf32> to vector<8x256xf32>
    %29 = arith.mulf %26, %28 : vector<8x256xf32>
    %c239_i32 = arith.constant 239 : i32
    %30 = tpu.dynamic_rotate %1 by %c239_i32 dim 1 : vector<8x256xf32>, i32 -> vector<8x256xf32>
    %c8 = arith.constant 8 : index
    %c0_10 = arith.constant 0 : index
    %31 = vector.load %arg2[%c8, %c0_10] : memref<9x256xf32, #tpu.memory_space<vmem>>, vector<1x256xf32>
    %32 = vector.broadcast %31 : vector<1x256xf32> to vector<8x256xf32>
    %33 = arith.mulf %30, %32 : vector<8x256xf32>
    %34 = tpu.concatenate %5, %9, %13, %17, %1, %21, %25, %29, %33 in 0 : vector<8x256xf32>, vector<8x256xf32>, vector<8x256xf32>, vector<8x256xf32>, vector<8x256xf32>, vector<8x256xf32>, vector<8x256xf32>, vector<8x256xf32>, vector<8x256xf32> -> vector<72x256xf32>
    %c0_11 = arith.constant 0 : index
    %c0_12 = arith.constant 0 : index
    %35 = vector.load %arg3[%c0_11, %c0_12] : memref<4x72xf32, #tpu.memory_space<vmem>>, vector<4x72xf32>
    %cst = arith.constant dense<0.000000e+00> : vector<4x256xf32>
    %36 = tpu.matmul %35, %34, %cst {dimension_numbers = #tpu.dot_dimension_numbers<[1], [0], [0], [1], [0, 0, 1, 1], [], []>} : vector<4x72xf32>, vector<72x256xf32>, vector<4x256xf32> -> vector<4x256xf32>
    %c0_13 = arith.constant 0 : index
    %c0_14 = arith.constant 0 : index
    %37 = vector.load %arg4[%c0_13, %c0_14] : memref<4x1xf32, #tpu.memory_space<vmem>>, vector<4x1xf32>
    %38 = vector.broadcast %37 : vector<4x1xf32> to vector<4x256xf32>
    %39 = arith.addf %36, %38 : vector<4x256xf32>
    %c0_15 = arith.constant 0 : index
    %c0_16 = arith.constant 0 : index
    %40 = vector.load %arg5[%c0_15, %c0_16] : memref<4x9xf32, #tpu.memory_space<vmem>>, vector<4x9xf32>
    %c17_i32_17 = arith.constant 17 : i32
    %41 = tpu.dynamic_rotate %39 by %c17_i32_17 dim 1 : vector<4x256xf32>, i32 -> vector<4x256xf32>
    %c0_18 = arith.constant 0 : index
    %c0_19 = arith.constant 0 : index
    %42 = vector.load %arg2[%c0_18, %c0_19] : memref<9x256xf32, #tpu.memory_space<vmem>>, vector<1x256xf32>
    %43 = vector.broadcast %42 : vector<1x256xf32> to vector<4x256xf32>
    %44 = arith.mulf %41, %43 : vector<4x256xf32>
    %c16_i32_20 = arith.constant 16 : i32
    %45 = tpu.dynamic_rotate %39 by %c16_i32_20 dim 1 : vector<4x256xf32>, i32 -> vector<4x256xf32>
    %c1_21 = arith.constant 1 : index
    %c0_22 = arith.constant 0 : index
    %46 = vector.load %arg2[%c1_21, %c0_22] : memref<9x256xf32, #tpu.memory_space<vmem>>, vector<1x256xf32>
    %47 = vector.broadcast %46 : vector<1x256xf32> to vector<4x256xf32>
    %48 = arith.mulf %45, %47 : vector<4x256xf32>
    %c15_i32_23 = arith.constant 15 : i32
    %49 = tpu.dynamic_rotate %39 by %c15_i32_23 dim 1 : vector<4x256xf32>, i32 -> vector<4x256xf32>
    %c2_24 = arith.constant 2 : index
    %c0_25 = arith.constant 0 : index
    %50 = vector.load %arg2[%c2_24, %c0_25] : memref<9x256xf32, #tpu.memory_space<vmem>>, vector<1x256xf32>
    %51 = vector.broadcast %50 : vector<1x256xf32> to vector<4x256xf32>
    %52 = arith.mulf %49, %51 : vector<4x256xf32>
    %c1_i32_26 = arith.constant 1 : i32
    %53 = tpu.dynamic_rotate %39 by %c1_i32_26 dim 1 : vector<4x256xf32>, i32 -> vector<4x256xf32>
    %c3_27 = arith.constant 3 : index
    %c0_28 = arith.constant 0 : index
    %54 = vector.load %arg2[%c3_27, %c0_28] : memref<9x256xf32, #tpu.memory_space<vmem>>, vector<1x256xf32>
    %55 = vector.broadcast %54 : vector<1x256xf32> to vector<4x256xf32>
    %56 = arith.mulf %53, %55 : vector<4x256xf32>
    %c255_i32_29 = arith.constant 255 : i32
    %57 = tpu.dynamic_rotate %39 by %c255_i32_29 dim 1 : vector<4x256xf32>, i32 -> vector<4x256xf32>
    %c5_30 = arith.constant 5 : index
    %c0_31 = arith.constant 0 : index
    %58 = vector.load %arg2[%c5_30, %c0_31] : memref<9x256xf32, #tpu.memory_space<vmem>>, vector<1x256xf32>
    %59 = vector.broadcast %58 : vector<1x256xf32> to vector<4x256xf32>
    %60 = arith.mulf %57, %59 : vector<4x256xf32>
    %c241_i32_32 = arith.constant 241 : i32
    %61 = tpu.dynamic_rotate %39 by %c241_i32_32 dim 1 : vector<4x256xf32>, i32 -> vector<4x256xf32>
    %c6_33 = arith.constant 6 : index
    %c0_34 = arith.constant 0 : index
    %62 = vector.load %arg2[%c6_33, %c0_34] : memref<9x256xf32, #tpu.memory_space<vmem>>, vector<1x256xf32>
    %63 = vector.broadcast %62 : vector<1x256xf32> to vector<4x256xf32>
    %64 = arith.mulf %61, %63 : vector<4x256xf32>
    %c240_i32_35 = arith.constant 240 : i32
    %65 = tpu.dynamic_rotate %39 by %c240_i32_35 dim 1 : vector<4x256xf32>, i32 -> vector<4x256xf32>
    %c7_36 = arith.constant 7 : index
    %c0_37 = arith.constant 0 : index
    %66 = vector.load %arg2[%c7_36, %c0_37] : memref<9x256xf32, #tpu.memory_space<vmem>>, vector<1x256xf32>
    %67 = vector.broadcast %66 : vector<1x256xf32> to vector<4x256xf32>
    %68 = arith.mulf %65, %67 : vector<4x256xf32>
    %c239_i32_38 = arith.constant 239 : i32
    %69 = tpu.dynamic_rotate %39 by %c239_i32_38 dim 1 : vector<4x256xf32>, i32 -> vector<4x256xf32>
    %c8_39 = arith.constant 8 : index
    %c0_40 = arith.constant 0 : index
    %70 = vector.load %arg2[%c8_39, %c0_40] : memref<9x256xf32, #tpu.memory_space<vmem>>, vector<1x256xf32>
    %71 = vector.broadcast %70 : vector<1x256xf32> to vector<4x256xf32>
    %72 = arith.mulf %69, %71 : vector<4x256xf32>
    %73 = vector.extract_strided_slice %40 {offsets = [0, 0], sizes = [4, 1], strides = [1, 1]} : vector<4x9xf32> to vector<4x1xf32>
    %74 = vector.broadcast %73 : vector<4x1xf32> to vector<4x256xf32>
    %75 = arith.mulf %74, %44 : vector<4x256xf32>
    %76 = vector.extract_strided_slice %40 {offsets = [0, 1], sizes = [4, 1], strides = [1, 1]} : vector<4x9xf32> to vector<4x1xf32>
    %77 = vector.broadcast %76 : vector<4x1xf32> to vector<4x256xf32>
    %78 = arith.mulf %77, %48 : vector<4x256xf32>
    %79 = arith.addf %75, %78 : vector<4x256xf32>
    %80 = vector.extract_strided_slice %40 {offsets = [0, 2], sizes = [4, 1], strides = [1, 1]} : vector<4x9xf32> to vector<4x1xf32>
    %81 = vector.broadcast %80 : vector<4x1xf32> to vector<4x256xf32>
    %82 = arith.mulf %81, %52 : vector<4x256xf32>
    %83 = arith.addf %79, %82 : vector<4x256xf32>
    %84 = vector.extract_strided_slice %40 {offsets = [0, 3], sizes = [4, 1], strides = [1, 1]} : vector<4x9xf32> to vector<4x1xf32>
    %85 = vector.broadcast %84 : vector<4x1xf32> to vector<4x256xf32>
    %86 = arith.mulf %85, %56 : vector<4x256xf32>
    %87 = vector.extract_strided_slice %40 {offsets = [0, 4], sizes = [4, 1], strides = [1, 1]} : vector<4x9xf32> to vector<4x1xf32>
    %88 = vector.broadcast %87 : vector<4x1xf32> to vector<4x256xf32>
    %89 = arith.mulf %88, %39 : vector<4x256xf32>
    %90 = arith.addf %86, %89 : vector<4x256xf32>
    %91 = vector.extract_strided_slice %40 {offsets = [0, 5], sizes = [4, 1], strides = [1, 1]} : vector<4x9xf32> to vector<4x1xf32>
    %92 = vector.broadcast %91 : vector<4x1xf32> to vector<4x256xf32>
    %93 = arith.mulf %92, %60 : vector<4x256xf32>
    %94 = arith.addf %90, %93 : vector<4x256xf32>
    %95 = vector.extract_strided_slice %40 {offsets = [0, 6], sizes = [4, 1], strides = [1, 1]} : vector<4x9xf32> to vector<4x1xf32>
    %96 = vector.broadcast %95 : vector<4x1xf32> to vector<4x256xf32>
    %97 = arith.mulf %96, %64 : vector<4x256xf32>
    %98 = vector.extract_strided_slice %40 {offsets = [0, 7], sizes = [4, 1], strides = [1, 1]} : vector<4x9xf32> to vector<4x1xf32>
    %99 = vector.broadcast %98 : vector<4x1xf32> to vector<4x256xf32>
    %100 = arith.mulf %99, %68 : vector<4x256xf32>
    %101 = arith.addf %97, %100 : vector<4x256xf32>
    %102 = vector.extract_strided_slice %40 {offsets = [0, 8], sizes = [4, 1], strides = [1, 1]} : vector<4x9xf32> to vector<4x1xf32>
    %103 = vector.broadcast %102 : vector<4x1xf32> to vector<4x256xf32>
    %104 = arith.mulf %103, %72 : vector<4x256xf32>
    %105 = arith.addf %101, %104 : vector<4x256xf32>
    %106 = arith.addf %83, %94 : vector<4x256xf32>
    %c0_41 = arith.constant 0 : index
    %c0_42 = arith.constant 0 : index
    %107 = vector.load %arg6[%c0_41, %c0_42] : memref<4x1xf32, #tpu.memory_space<vmem>>, vector<4x1xf32>
    %108 = vector.broadcast %107 : vector<4x1xf32> to vector<4x256xf32>
    %109 = arith.addf %105, %108 : vector<4x256xf32>
    %110 = arith.addf %106, %109 : vector<4x256xf32>
    %cst_43 = arith.constant 0.000000e+00 : f32
    %111 = vector.broadcast %cst_43 : f32 to vector<4x256xf32>
    %112 = arith.maximumf %110, %111 : vector<4x256xf32>
    %cst_44 = arith.constant 0.000000e+00 : f32
    %113 = vector.broadcast %cst_44 : f32 to vector<4x256xf32>
    %114 = arith.maximumf %44, %113 : vector<4x256xf32>
    %c17_i32_45 = arith.constant 17 : i32
    %115 = tpu.dynamic_rotate %112 by %c17_i32_45 dim 1 : vector<4x256xf32>, i32 -> vector<4x256xf32>
    %c0_46 = arith.constant 0 : index
    %c0_47 = arith.constant 0 : index
    %116 = vector.load %arg2[%c0_46, %c0_47] : memref<9x256xf32, #tpu.memory_space<vmem>>, vector<1x256xf32>
    %117 = vector.broadcast %116 : vector<1x256xf32> to vector<4x256xf32>
    %118 = arith.mulf %115, %117 : vector<4x256xf32>
    %119 = tpu.concatenate %114, %118 in 0 : vector<4x256xf32>, vector<4x256xf32> -> vector<8x256xf32>
    %cst_48 = arith.constant 0.000000e+00 : f32
    %120 = vector.broadcast %cst_48 : f32 to vector<4x256xf32>
    %121 = arith.maximumf %48, %120 : vector<4x256xf32>
    %c16_i32_49 = arith.constant 16 : i32
    %122 = tpu.dynamic_rotate %112 by %c16_i32_49 dim 1 : vector<4x256xf32>, i32 -> vector<4x256xf32>
    %c1_50 = arith.constant 1 : index
    %c0_51 = arith.constant 0 : index
    %123 = vector.load %arg2[%c1_50, %c0_51] : memref<9x256xf32, #tpu.memory_space<vmem>>, vector<1x256xf32>
    %124 = vector.broadcast %123 : vector<1x256xf32> to vector<4x256xf32>
    %125 = arith.mulf %122, %124 : vector<4x256xf32>
    %126 = tpu.concatenate %121, %125 in 0 : vector<4x256xf32>, vector<4x256xf32> -> vector<8x256xf32>
    %cst_52 = arith.constant 0.000000e+00 : f32
    %127 = vector.broadcast %cst_52 : f32 to vector<4x256xf32>
    %128 = arith.maximumf %52, %127 : vector<4x256xf32>
    %c15_i32_53 = arith.constant 15 : i32
    %129 = tpu.dynamic_rotate %112 by %c15_i32_53 dim 1 : vector<4x256xf32>, i32 -> vector<4x256xf32>
    %c2_54 = arith.constant 2 : index
    %c0_55 = arith.constant 0 : index
    %130 = vector.load %arg2[%c2_54, %c0_55] : memref<9x256xf32, #tpu.memory_space<vmem>>, vector<1x256xf32>
    %131 = vector.broadcast %130 : vector<1x256xf32> to vector<4x256xf32>
    %132 = arith.mulf %129, %131 : vector<4x256xf32>
    %133 = tpu.concatenate %128, %132 in 0 : vector<4x256xf32>, vector<4x256xf32> -> vector<8x256xf32>
    %cst_56 = arith.constant 0.000000e+00 : f32
    %134 = vector.broadcast %cst_56 : f32 to vector<4x256xf32>
    %135 = arith.maximumf %56, %134 : vector<4x256xf32>
    %c1_i32_57 = arith.constant 1 : i32
    %136 = tpu.dynamic_rotate %112 by %c1_i32_57 dim 1 : vector<4x256xf32>, i32 -> vector<4x256xf32>
    %c3_58 = arith.constant 3 : index
    %c0_59 = arith.constant 0 : index
    %137 = vector.load %arg2[%c3_58, %c0_59] : memref<9x256xf32, #tpu.memory_space<vmem>>, vector<1x256xf32>
    %138 = vector.broadcast %137 : vector<1x256xf32> to vector<4x256xf32>
    %139 = arith.mulf %136, %138 : vector<4x256xf32>
    %140 = tpu.concatenate %135, %139 in 0 : vector<4x256xf32>, vector<4x256xf32> -> vector<8x256xf32>
    %cst_60 = arith.constant 0.000000e+00 : f32
    %141 = vector.broadcast %cst_60 : f32 to vector<4x256xf32>
    %142 = arith.maximumf %39, %141 : vector<4x256xf32>
    %143 = tpu.concatenate %142, %112 in 0 : vector<4x256xf32>, vector<4x256xf32> -> vector<8x256xf32>
    %cst_61 = arith.constant 0.000000e+00 : f32
    %144 = vector.broadcast %cst_61 : f32 to vector<4x256xf32>
    %145 = arith.maximumf %60, %144 : vector<4x256xf32>
    %c255_i32_62 = arith.constant 255 : i32
    %146 = tpu.dynamic_rotate %112 by %c255_i32_62 dim 1 : vector<4x256xf32>, i32 -> vector<4x256xf32>
    %c5_63 = arith.constant 5 : index
    %c0_64 = arith.constant 0 : index
    %147 = vector.load %arg2[%c5_63, %c0_64] : memref<9x256xf32, #tpu.memory_space<vmem>>, vector<1x256xf32>
    %148 = vector.broadcast %147 : vector<1x256xf32> to vector<4x256xf32>
    %149 = arith.mulf %146, %148 : vector<4x256xf32>
    %150 = tpu.concatenate %145, %149 in 0 : vector<4x256xf32>, vector<4x256xf32> -> vector<8x256xf32>
    %cst_65 = arith.constant 0.000000e+00 : f32
    %151 = vector.broadcast %cst_65 : f32 to vector<4x256xf32>
    %152 = arith.maximumf %64, %151 : vector<4x256xf32>
    %c241_i32_66 = arith.constant 241 : i32
    %153 = tpu.dynamic_rotate %112 by %c241_i32_66 dim 1 : vector<4x256xf32>, i32 -> vector<4x256xf32>
    %c6_67 = arith.constant 6 : index
    %c0_68 = arith.constant 0 : index
    %154 = vector.load %arg2[%c6_67, %c0_68] : memref<9x256xf32, #tpu.memory_space<vmem>>, vector<1x256xf32>
    %155 = vector.broadcast %154 : vector<1x256xf32> to vector<4x256xf32>
    %156 = arith.mulf %153, %155 : vector<4x256xf32>
    %157 = tpu.concatenate %152, %156 in 0 : vector<4x256xf32>, vector<4x256xf32> -> vector<8x256xf32>
    %cst_69 = arith.constant 0.000000e+00 : f32
    %158 = vector.broadcast %cst_69 : f32 to vector<4x256xf32>
    %159 = arith.maximumf %68, %158 : vector<4x256xf32>
    %c240_i32_70 = arith.constant 240 : i32
    %160 = tpu.dynamic_rotate %112 by %c240_i32_70 dim 1 : vector<4x256xf32>, i32 -> vector<4x256xf32>
    %c7_71 = arith.constant 7 : index
    %c0_72 = arith.constant 0 : index
    %161 = vector.load %arg2[%c7_71, %c0_72] : memref<9x256xf32, #tpu.memory_space<vmem>>, vector<1x256xf32>
    %162 = vector.broadcast %161 : vector<1x256xf32> to vector<4x256xf32>
    %163 = arith.mulf %160, %162 : vector<4x256xf32>
    %164 = tpu.concatenate %159, %163 in 0 : vector<4x256xf32>, vector<4x256xf32> -> vector<8x256xf32>
    %cst_73 = arith.constant 0.000000e+00 : f32
    %165 = vector.broadcast %cst_73 : f32 to vector<4x256xf32>
    %166 = arith.maximumf %72, %165 : vector<4x256xf32>
    %c239_i32_74 = arith.constant 239 : i32
    %167 = tpu.dynamic_rotate %112 by %c239_i32_74 dim 1 : vector<4x256xf32>, i32 -> vector<4x256xf32>
    %c8_75 = arith.constant 8 : index
    %c0_76 = arith.constant 0 : index
    %168 = vector.load %arg2[%c8_75, %c0_76] : memref<9x256xf32, #tpu.memory_space<vmem>>, vector<1x256xf32>
    %169 = vector.broadcast %168 : vector<1x256xf32> to vector<4x256xf32>
    %170 = arith.mulf %167, %169 : vector<4x256xf32>
    %171 = tpu.concatenate %166, %170 in 0 : vector<4x256xf32>, vector<4x256xf32> -> vector<8x256xf32>
    %172 = tpu.concatenate %119, %126, %133, %140, %143, %150, %157, %164, %171 in 0 : vector<8x256xf32>, vector<8x256xf32>, vector<8x256xf32>, vector<8x256xf32>, vector<8x256xf32>, vector<8x256xf32>, vector<8x256xf32>, vector<8x256xf32>, vector<8x256xf32> -> vector<72x256xf32>
    %c0_77 = arith.constant 0 : index
    %c0_78 = arith.constant 0 : index
    %173 = vector.load %arg7[%c0_77, %c0_78] : memref<4x72xf32, #tpu.memory_space<vmem>>, vector<4x72xf32>
    %cst_79 = arith.constant dense<0.000000e+00> : vector<4x256xf32>
    %174 = tpu.matmul %173, %172, %cst_79 {dimension_numbers = #tpu.dot_dimension_numbers<[1], [0], [0], [1], [0, 0, 1, 1], [], []>} : vector<4x72xf32>, vector<72x256xf32>, vector<4x256xf32> -> vector<4x256xf32>
    %c0_80 = arith.constant 0 : index
    %c0_81 = arith.constant 0 : index
    %175 = vector.load %arg8[%c0_80, %c0_81] : memref<4x1xf32, #tpu.memory_space<vmem>>, vector<4x1xf32>
    %176 = vector.broadcast %175 : vector<4x1xf32> to vector<4x256xf32>
    %177 = arith.addf %174, %176 : vector<4x256xf32>
    %c0_82 = arith.constant 0 : index
    %c0_83 = arith.constant 0 : index
    %178 = vector.load %arg9[%c0_82, %c0_83] : memref<4x9xf32, #tpu.memory_space<vmem>>, vector<4x9xf32>
    %c17_i32_84 = arith.constant 17 : i32
    %179 = tpu.dynamic_rotate %177 by %c17_i32_84 dim 1 : vector<4x256xf32>, i32 -> vector<4x256xf32>
    %c0_85 = arith.constant 0 : index
    %c0_86 = arith.constant 0 : index
    %180 = vector.load %arg2[%c0_85, %c0_86] : memref<9x256xf32, #tpu.memory_space<vmem>>, vector<1x256xf32>
    %181 = vector.broadcast %180 : vector<1x256xf32> to vector<4x256xf32>
    %182 = arith.mulf %179, %181 : vector<4x256xf32>
    %c16_i32_87 = arith.constant 16 : i32
    %183 = tpu.dynamic_rotate %177 by %c16_i32_87 dim 1 : vector<4x256xf32>, i32 -> vector<4x256xf32>
    %c1_88 = arith.constant 1 : index
    %c0_89 = arith.constant 0 : index
    %184 = vector.load %arg2[%c1_88, %c0_89] : memref<9x256xf32, #tpu.memory_space<vmem>>, vector<1x256xf32>
    %185 = vector.broadcast %184 : vector<1x256xf32> to vector<4x256xf32>
    %186 = arith.mulf %183, %185 : vector<4x256xf32>
    %c15_i32_90 = arith.constant 15 : i32
    %187 = tpu.dynamic_rotate %177 by %c15_i32_90 dim 1 : vector<4x256xf32>, i32 -> vector<4x256xf32>
    %c2_91 = arith.constant 2 : index
    %c0_92 = arith.constant 0 : index
    %188 = vector.load %arg2[%c2_91, %c0_92] : memref<9x256xf32, #tpu.memory_space<vmem>>, vector<1x256xf32>
    %189 = vector.broadcast %188 : vector<1x256xf32> to vector<4x256xf32>
    %190 = arith.mulf %187, %189 : vector<4x256xf32>
    %c1_i32_93 = arith.constant 1 : i32
    %191 = tpu.dynamic_rotate %177 by %c1_i32_93 dim 1 : vector<4x256xf32>, i32 -> vector<4x256xf32>
    %c3_94 = arith.constant 3 : index
    %c0_95 = arith.constant 0 : index
    %192 = vector.load %arg2[%c3_94, %c0_95] : memref<9x256xf32, #tpu.memory_space<vmem>>, vector<1x256xf32>
    %193 = vector.broadcast %192 : vector<1x256xf32> to vector<4x256xf32>
    %194 = arith.mulf %191, %193 : vector<4x256xf32>
    %c255_i32_96 = arith.constant 255 : i32
    %195 = tpu.dynamic_rotate %177 by %c255_i32_96 dim 1 : vector<4x256xf32>, i32 -> vector<4x256xf32>
    %c5_97 = arith.constant 5 : index
    %c0_98 = arith.constant 0 : index
    %196 = vector.load %arg2[%c5_97, %c0_98] : memref<9x256xf32, #tpu.memory_space<vmem>>, vector<1x256xf32>
    %197 = vector.broadcast %196 : vector<1x256xf32> to vector<4x256xf32>
    %198 = arith.mulf %195, %197 : vector<4x256xf32>
    %c241_i32_99 = arith.constant 241 : i32
    %199 = tpu.dynamic_rotate %177 by %c241_i32_99 dim 1 : vector<4x256xf32>, i32 -> vector<4x256xf32>
    %c6_100 = arith.constant 6 : index
    %c0_101 = arith.constant 0 : index
    %200 = vector.load %arg2[%c6_100, %c0_101] : memref<9x256xf32, #tpu.memory_space<vmem>>, vector<1x256xf32>
    %201 = vector.broadcast %200 : vector<1x256xf32> to vector<4x256xf32>
    %202 = arith.mulf %199, %201 : vector<4x256xf32>
    %c240_i32_102 = arith.constant 240 : i32
    %203 = tpu.dynamic_rotate %177 by %c240_i32_102 dim 1 : vector<4x256xf32>, i32 -> vector<4x256xf32>
    %c7_103 = arith.constant 7 : index
    %c0_104 = arith.constant 0 : index
    %204 = vector.load %arg2[%c7_103, %c0_104] : memref<9x256xf32, #tpu.memory_space<vmem>>, vector<1x256xf32>
    %205 = vector.broadcast %204 : vector<1x256xf32> to vector<4x256xf32>
    %206 = arith.mulf %203, %205 : vector<4x256xf32>
    %c239_i32_105 = arith.constant 239 : i32
    %207 = tpu.dynamic_rotate %177 by %c239_i32_105 dim 1 : vector<4x256xf32>, i32 -> vector<4x256xf32>
    %c8_106 = arith.constant 8 : index
    %c0_107 = arith.constant 0 : index
    %208 = vector.load %arg2[%c8_106, %c0_107] : memref<9x256xf32, #tpu.memory_space<vmem>>, vector<1x256xf32>
    %209 = vector.broadcast %208 : vector<1x256xf32> to vector<4x256xf32>
    %210 = arith.mulf %207, %209 : vector<4x256xf32>
    %211 = vector.extract_strided_slice %178 {offsets = [0, 0], sizes = [4, 1], strides = [1, 1]} : vector<4x9xf32> to vector<4x1xf32>
    %212 = vector.broadcast %211 : vector<4x1xf32> to vector<4x256xf32>
    %213 = arith.mulf %212, %182 : vector<4x256xf32>
    %214 = vector.extract_strided_slice %178 {offsets = [0, 1], sizes = [4, 1], strides = [1, 1]} : vector<4x9xf32> to vector<4x1xf32>
    %215 = vector.broadcast %214 : vector<4x1xf32> to vector<4x256xf32>
    %216 = arith.mulf %215, %186 : vector<4x256xf32>
    %217 = arith.addf %213, %216 : vector<4x256xf32>
    %218 = vector.extract_strided_slice %178 {offsets = [0, 2], sizes = [4, 1], strides = [1, 1]} : vector<4x9xf32> to vector<4x1xf32>
    %219 = vector.broadcast %218 : vector<4x1xf32> to vector<4x256xf32>
    %220 = arith.mulf %219, %190 : vector<4x256xf32>
    %221 = arith.addf %217, %220 : vector<4x256xf32>
    %222 = vector.extract_strided_slice %178 {offsets = [0, 3], sizes = [4, 1], strides = [1, 1]} : vector<4x9xf32> to vector<4x1xf32>
    %223 = vector.broadcast %222 : vector<4x1xf32> to vector<4x256xf32>
    %224 = arith.mulf %223, %194 : vector<4x256xf32>
    %225 = vector.extract_strided_slice %178 {offsets = [0, 4], sizes = [4, 1], strides = [1, 1]} : vector<4x9xf32> to vector<4x1xf32>
    %226 = vector.broadcast %225 : vector<4x1xf32> to vector<4x256xf32>
    %227 = arith.mulf %226, %177 : vector<4x256xf32>
    %228 = arith.addf %224, %227 : vector<4x256xf32>
    %229 = vector.extract_strided_slice %178 {offsets = [0, 5], sizes = [4, 1], strides = [1, 1]} : vector<4x9xf32> to vector<4x1xf32>
    %230 = vector.broadcast %229 : vector<4x1xf32> to vector<4x256xf32>
    %231 = arith.mulf %230, %198 : vector<4x256xf32>
    %232 = arith.addf %228, %231 : vector<4x256xf32>
    %233 = vector.extract_strided_slice %178 {offsets = [0, 6], sizes = [4, 1], strides = [1, 1]} : vector<4x9xf32> to vector<4x1xf32>
    %234 = vector.broadcast %233 : vector<4x1xf32> to vector<4x256xf32>
    %235 = arith.mulf %234, %202 : vector<4x256xf32>
    %236 = vector.extract_strided_slice %178 {offsets = [0, 7], sizes = [4, 1], strides = [1, 1]} : vector<4x9xf32> to vector<4x1xf32>
    %237 = vector.broadcast %236 : vector<4x1xf32> to vector<4x256xf32>
    %238 = arith.mulf %237, %206 : vector<4x256xf32>
    %239 = arith.addf %235, %238 : vector<4x256xf32>
    %240 = vector.extract_strided_slice %178 {offsets = [0, 8], sizes = [4, 1], strides = [1, 1]} : vector<4x9xf32> to vector<4x1xf32>
    %241 = vector.broadcast %240 : vector<4x1xf32> to vector<4x256xf32>
    %242 = arith.mulf %241, %210 : vector<4x256xf32>
    %243 = arith.addf %239, %242 : vector<4x256xf32>
    %244 = arith.addf %221, %232 : vector<4x256xf32>
    %c0_108 = arith.constant 0 : index
    %c0_109 = arith.constant 0 : index
    %245 = vector.load %arg10[%c0_108, %c0_109] : memref<4x1xf32, #tpu.memory_space<vmem>>, vector<4x1xf32>
    %246 = vector.broadcast %245 : vector<4x1xf32> to vector<4x256xf32>
    %247 = arith.addf %243, %246 : vector<4x256xf32>
    %248 = arith.addf %244, %247 : vector<4x256xf32>
    %249 = vector.extract_strided_slice %1 {offsets = [0, 0], sizes = [4, 256], strides = [1, 1]} : vector<8x256xf32> to vector<4x256xf32>
    %250 = arith.addf %177, %249 : vector<4x256xf32>
    %cst_110 = arith.constant 0.000000e+00 : f32
    %251 = vector.broadcast %cst_110 : f32 to vector<4x256xf32>
    %252 = arith.maximumf %250, %251 : vector<4x256xf32>
    %253 = vector.extract_strided_slice %1 {offsets = [4, 0], sizes = [4, 256], strides = [1, 1]} : vector<8x256xf32> to vector<4x256xf32>
    %254 = arith.addf %248, %253 : vector<4x256xf32>
    %cst_111 = arith.constant 0.000000e+00 : f32
    %255 = vector.broadcast %cst_111 : f32 to vector<4x256xf32>
    %256 = arith.maximumf %254, %255 : vector<4x256xf32>
    %257 = tpu.concatenate %252, %256 in 0 : vector<4x256xf32>, vector<4x256xf32> -> vector<8x256xf32>
    %c0_112 = arith.constant 0 : index
    %c0_113 = arith.constant 0 : index
    %c0_114 = arith.constant 0 : index
    %258 = vector.load %arg11[%c0_112, %c0_113, %c0_114] : memref<1x8x256xf32, #tpu.memory_space<vmem>>, vector<1x8x256xf32>
    %259 = vector.shape_cast %258 : vector<1x8x256xf32> to vector<8x256xf32>
    %260 = vector.shape_cast %257 : vector<8x256xf32> to vector<1x8x256xf32>
    tpu.vector_store %arg11[%c0_112, %c0_113, %c0_114], %260 {strides = array<i32>} : memref<1x8x256xf32, #tpu.memory_space<vmem>>, vector<1x8x256xf32>,
    return
  }
  func.func @transform_0(%arg0: i32) -> (i32, i32, i32) {
    %c0_i32 = arith.constant 0 : i32
    %c0_i32_0 = arith.constant 0 : i32
    %c0_i32_1 = arith.constant 0 : i32
    return %arg0, %c0_i32, %c0_i32_0 : i32, i32, i32
  }
  func.func @transform_1(%arg0: i32) -> (i32, i32) {
    %c0_i32 = arith.constant 0 : i32
    %c0_i32_0 = arith.constant 0 : i32
    %c0_i32_1 = arith.constant 0 : i32
    return %c0_i32, %c0_i32_0 : i32, i32
  }
  func.func @transform_2(%arg0: i32) -> (i32, i32) {
    %c0_i32 = arith.constant 0 : i32
    %c0_i32_0 = arith.constant 0 : i32
    %c0_i32_1 = arith.constant 0 : i32
    return %c0_i32, %c0_i32_0 : i32, i32
  }
  func.func @transform_3(%arg0: i32) -> (i32, i32) {
    %c0_i32 = arith.constant 0 : i32
    %c0_i32_0 = arith.constant 0 : i32
    %c0_i32_1 = arith.constant 0 : i32
    return %c0_i32, %c0_i32_0 : i32, i32
  }
  func.func @transform_4(%arg0: i32) -> (i32, i32) {
    %c0_i32 = arith.constant 0 : i32
    %c0_i32_0 = arith.constant 0 : i32
    %c0_i32_1 = arith.constant 0 : i32
    return %c0_i32, %c0_i32_0 : i32, i32
  }
  func.func @transform_5(%arg0: i32) -> (i32, i32) {
    %c0_i32 = arith.constant 0 : i32
    %c0_i32_0 = arith.constant 0 : i32
    %c0_i32_1 = arith.constant 0 : i32
    return %c0_i32, %c0_i32_0 : i32, i32
  }
  func.func @transform_6(%arg0: i32) -> (i32, i32) {
    %c0_i32 = arith.constant 0 : i32
    %c0_i32_0 = arith.constant 0 : i32
    %c0_i32_1 = arith.constant 0 : i32
    return %c0_i32, %c0_i32_0 : i32, i32
  }
  func.func @transform_7(%arg0: i32) -> (i32, i32) {
    %c0_i32 = arith.constant 0 : i32
    %c0_i32_0 = arith.constant 0 : i32
    %c0_i32_1 = arith.constant 0 : i32
    return %c0_i32, %c0_i32_0 : i32, i32
  }
  func.func @transform_8(%arg0: i32) -> (i32, i32) {
    %c0_i32 = arith.constant 0 : i32
    %c0_i32_0 = arith.constant 0 : i32
    %c0_i32_1 = arith.constant 0 : i32
    return %c0_i32, %c0_i32_0 : i32, i32
  }
  func.func @transform_9(%arg0: i32) -> (i32, i32) {
    %c0_i32 = arith.constant 0 : i32
    %c0_i32_0 = arith.constant 0 : i32
    %c0_i32_1 = arith.constant 0 : i32
    return %c0_i32, %c0_i32_0 : i32, i32
  }
  func.func @transform_10(%arg0: i32) -> (i32, i32, i32) {
    %c0_i32 = arith.constant 0 : i32
    %c0_i32_0 = arith.constant 0 : i32
    %c0_i32_1 = arith.constant 0 : i32
    return %arg0, %c0_i32, %c0_i32_0 : i32, i32, i32
  }
}

</mosaic_0001>

<llo_original>
// kernel: tpu_custom_call.1
$region0: #{tpu_custom_call.1}
  #allocation0 [shape = 'u32[]', space=smem, size = 0x4, offset = 0x4, fixed_abs, tag = 'smem constant byte address 0x4 - core index']
  #allocation1 [shape = 'u32[144,128]{1,0:T(1,128)}', space=vmem, size = 0x12000, scoped, tag = 'internal scratch']
  %s0 = inlined_call_operand.hbm [shape: f32[2,8,256], index: 0, kind: input, shape index: {}]
  %s1 = inlined_call_operand.hbm [shape: f32[9,256], index: 1, kind: input, shape index: {}]
  %s2 = inlined_call_operand.vmem [shape: f32[4,72], index: 2, kind: input, shape index: {}]
  %s3 = inlined_call_operand.vmem [shape: f32[4,1], index: 3, kind: input, shape index: {}]
  %s4 = inlined_call_operand.vmem [shape: f32[4,9], index: 4, kind: input, shape index: {}]
  %s5 = inlined_call_operand.vmem [shape: f32[4,1], index: 5, kind: input, shape index: {}]
  %s6 = inlined_call_operand.vmem [shape: f32[4,72], index: 6, kind: input, shape index: {}]
  %s7 = inlined_call_operand.vmem [shape: f32[4,1], index: 7, kind: input, shape index: {}]
  %s8 = inlined_call_operand.vmem [shape: f32[4,9], index: 8, kind: input, shape index: {}]
  %s9 = inlined_call_operand.vmem [shape: f32[4,1], index: 9, kind: input, shape index: {}]
  %s10 = inlined_call_operand.hbm [shape: f32[2,8,256], index: 10, kind: output, shape index: {}]
  %s11 = sld [smem:[#allocation0]]
  $region81: #{tpu_custom_call.1} parent=0
    _
  %s13 = ssub.s32 1, %s11
  %s14 = scalar_select 0, %s13, %s11
  $region1: #{tpu_custom_call.1} parent=0
    #allocation2 [shape = 'u8[16384]{0}', space=vmem, size = 0x4000, scoped, tag = 'input window, operand 0']
    #allocation3 [shape = 's32[2]{0}', space=sflag, size = 0x8, scoped, tag = 'scoped memory for tpu_custom_call.1']
    #allocation4 [shape = 's32[2]{0}', space=sflag, size = 0x8, scoped, tag = 'scoped memory for tpu_custom_call.1']
    #allocation5 [shape = 'u8[16384]{0}', space=vmem, size = 0x4000, scoped, tag = 'input window, operand 1, single buffered']
    #allocation6 [shape = 's32[1]{0}', space=sflag, size = 0x4, scoped, tag = 'scoped memory for tpu_custom_call.1']
    #allocation7 [shape = 'u8[16384]{0}', space=vmem, size = 0x4000, scoped, tag = 'output window, operand 0']
    %15 = vsyncpa [#allocation3], 0
    %s16 = scalar_lea.sflag [#allocation3], 1
    %17 = vsyncpa %s16, 0
    %18 = vsyncpa [#allocation6], 0
    %19 = vsyncpa [#allocation4], 0
    %s20 = scalar_lea.sflag [#allocation4], 1
    %21 = vsyncpa %s20, 0
    loop: start=0, step=1, limit=4
    $region2: #{tpu_custom_call.1} parent=1 // loop_pre_header
      _
    $region3: #{tpu_custom_call.1} parent=1 // loop_header
      %s23 = sphi 0, %s27
      %p24 = scmp.ge.s32.totalorder %s23, 4
      %s33 = sphi 0, %s35
      %s36 = sphi 0, %s33
      %s37 = sphi 0, %s36
      %s53 = sphi 0, %s37
      %s57 = sphi 0, %s57
      %s59 = sphi 0, %s57
      %s60 = sphi 0, %s59
      %s74 = sphi 0, %s60
      %s78 = sphi 0, %s78
      %s80 = sphi 0, %s78
      %s81 = sphi 0, %s80
      %s95 = sphi 0, %s81
      %s99 = sphi 0, %s99
      %s101 = sphi 0, %s99
      %s102 = sphi 0, %s101
      %s116 = sphi 0, %s102
      %s120 = sphi 0, %s120
      %s122 = sphi 0, %s120
      %s123 = sphi 0, %s122
      %s137 = sphi 0, %s123
      %s141 = sphi 0, %s141
      %s143 = sphi 0, %s141
      %s144 = sphi 0, %s143
      %s158 = sphi 0, %s144
      %s162 = sphi 0, %s162
      %s164 = sphi 0, %s162
      %s165 = sphi 0, %s164
      %s179 = sphi 0, %s165
      %s183 = sphi 0, %s183
      %s185 = sphi 0, %s183
      %s186 = sphi 0, %s185
      %s200 = sphi 0, %s186
      %s204 = sphi 0, %s204
      %s206 = sphi 0, %s204
      %s207 = sphi 0, %s206
      %s221 = sphi 0, %s207
      %s225 = sphi 0, %s225
      %s227 = sphi 0, %s225
      %s228 = sphi 0, %s227
      %s242 = sphi 0, %s228
      %s248 = sphi 0, %s250
      %s251 = sphi 0, %s248
      %s252 = sphi 0, %s251
      %s268 = sphi 0, %s252
    $region4: #{tpu_custom_call.1} parent=1 // loop_header_branch
      %26 = sbr.rel (%p24) target = $region8
    $region5: #{tpu_custom_call.1} parent=1 // loop_body
      %s28 = ssub.s32 %s23, 1
      %s29 = ssub.s32 %s23, 2
      %s30 = sadd.s32 %s23, 1
      %s31 = ssub.s32 %s23, %s30
      %p32 = scmp.eq.s32.totalorder %s31, 0
      %s34 = sadd.s32 %s33, 1
      %s35 = scalar_select %p32, %s33, %s34
      %p38 = pneg %p32
      %p39 = scmp.eq.s32.totalorder %s23, 1
      %p40 = por %p38, %p39
      %p41 = scmp.ne.s32.totalorder %s33, %s36
      %p42 = scmp.eq.s32.totalorder %s23, 0
      %p43 = por %p41, %p42
      %p44 = scmp.ne.s32.totalorder %s33, %s36
      %p45 = scmp.eq.s32.totalorder %s28, 1
      %p46 = por %p44, %p45
      %p47 = scmp.ne.s32.totalorder %s36, %s37
      %p48 = scmp.eq.s32.totalorder %s28, 0
      %p49 = por %p47, %p48
      %p50 = scmp.ne.s32.totalorder %s36, %s37
      %p51 = scmp.eq.s32.totalorder %s29, 1
      %p52 = por %p50, %p51
      %p54 = scmp.ne.s32.totalorder %s37, %s53
      %p55 = scmp.eq.s32.totalorder %s29, 0
      %p56 = por %p54, %p55
      %s58 = sadd.s32 %s57, 1
      %p61 = scmp.eq.s32.totalorder %s23, 1
      %p62 = scmp.ne.s32.totalorder %s57, %s59
      %p63 = scmp.eq.s32.totalorder %s23, 0
      %p64 = por %p62, %p63
      %p65 = scmp.ne.s32.totalorder %s57, %s59
      %p66 = scmp.eq.s32.totalorder %s28, 1
      %p67 = por %p65, %p66
      %p68 = scmp.ne.s32.totalorder %s59, %s60
      %p69 = scmp.eq.s32.totalorder %s28, 0
      %p70 = por %p68, %p69
      %p71 = scmp.ne.s32.totalorder %s59, %s60
      %p72 = scmp.eq.s32.totalorder %s29, 1
      %p73 = por %p71, %p72
      %p75 = scmp.ne.s32.totalorder %s60, %s74
      %p76 = scmp.eq.s32.totalorder %s29, 0
      %p77 = por %p75, %p76
      %s79 = sadd.s32 %s78, 1
      %p82 = scmp.eq.s32.totalorder %s23, 1
      %p83 = scmp.ne.s32.totalorder %s78, %s80
      %p84 = scmp.eq.s32.totalorder %s23, 0
      %p85 = por %p83, %p84
      %p86 = scmp.ne.s32.totalorder %s78, %s80
      %p87 = scmp.eq.s32.totalorder %s28, 1
      %p88 = por %p86, %p87
      %p89 = scmp.ne.s32.totalorder %s80, %s81
      %p90 = scmp.eq.s32.totalorder %s28, 0
      %p91 = por %p89, %p90
      %p92 = scmp.ne.s32.totalorder %s80, %s81
      %p93 = scmp.eq.s32.totalorder %s29, 1
      %p94 = por %p92, %p93
      %p96 = scmp.ne.s32.totalorder %s81, %s95
      %p97 = scmp.eq.s32.totalorder %s29, 0
      %p98 = por %p96, %p97
      %s100 = sadd.s32 %s99, 1
      %p103 = scmp.eq.s32.totalorder %s23, 1
      %p104 = scmp.ne.s32.totalorder %s99, %s101
      %p105 = scmp.eq.s32.totalorder %s23, 0
      %p106 = por %p104, %p105
      %p107 = scmp.ne.s32.totalorder %s99, %s101
      %p108 = scmp.eq.s32.totalorder %s28, 1
      %p109 = por %p107, %p108
      %p110 = scmp.ne.s32.totalorder %s101, %s102
      %p111 = scmp.eq.s32.totalorder %s28, 0
      %p112 = por %p110, %p111
      %p113 = scmp.ne.s32.totalorder %s101, %s102
      %p114 = scmp.eq.s32.totalorder %s29, 1
      %p115 = por %p113, %p114
      %p117 = scmp.ne.s32.totalorder %s102, %s116
      %p118 = scmp.eq.s32.totalorder %s29, 0
      %p119 = por %p117, %p118
      %s121 = sadd.s32 %s120, 1
      %p124 = scmp.eq.s32.totalorder %s23, 1
      %p125 = scmp.ne.s32.totalorder %s120, %s122
      %p126 = scmp.eq.s32.totalorder %s23, 0
      %p127 = por %p125, %p126
      %p128 = scmp.ne.s32.totalorder %s120, %s122
      %p129 = scmp.eq.s32.totalorder %s28, 1
      %p130 = por %p128, %p129
      %p131 = scmp.ne.s32.totalorder %s122, %s123
      %p132 = scmp.eq.s32.totalorder %s28, 0
      %p133 = por %p131, %p132
      %p134 = scmp.ne.s32.totalorder %s122, %s123
      %p135 = scmp.eq.s32.totalorder %s29, 1
      %p136 = por %p134, %p135
      %p138 = scmp.ne.s32.totalorder %s123, %s137
      %p139 = scmp.eq.s32.totalorder %s29, 0
      %p140 = por %p138, %p139
      %s142 = sadd.s32 %s141, 1
      %p145 = scmp.eq.s32.totalorder %s23, 1
      %p146 = scmp.ne.s32.totalorder %s141, %s143
      %p147 = scmp.eq.s32.totalorder %s23, 0
      %p148 = por %p146, %p147
      %p149 = scmp.ne.s32.totalorder %s141, %s143
      %p150 = scmp.eq.s32.totalorder %s28, 1
      %p151 = por %p149, %p150
      %p152 = scmp.ne.s32.totalorder %s143, %s144
      %p153 = scmp.eq.s32.totalorder %s28, 0
      %p154 = por %p152, %p153
      %p155 = scmp.ne.s32.totalorder %s143, %s144
      %p156 = scmp.eq.s32.totalorder %s29, 1
      %p157 = por %p155, %p156
      %p159 = scmp.ne.s32.totalorder %s144, %s158
      %p160 = scmp.eq.s32.totalorder %s29, 0
      %p161 = por %p159, %p160
      %s163 = sadd.s32 %s162, 1
      %p166 = scmp.eq.s32.totalorder %s23, 1
      %p167 = scmp.ne.s32.totalorder %s162, %s164
      %p168 = scmp.eq.s32.totalorder %s23, 0
      %p169 = por %p167, %p168
      %p170 = scmp.ne.s32.totalorder %s162, %s164
      %p171 = scmp.eq.s32.totalorder %s28, 1
      %p172 = por %p170, %p171
      %p173 = scmp.ne.s32.totalorder %s164, %s165
      %p174 = scmp.eq.s32.totalorder %s28, 0
      %p175 = por %p173, %p174
      %p176 = scmp.ne.s32.totalorder %s164, %s165
      %p177 = scmp.eq.s32.totalorder %s29, 1
      %p178 = por %p176, %p177
      %p180 = scmp.ne.s32.totalorder %s165, %s179
      %p181 = scmp.eq.s32.totalorder %s29, 0
      %p182 = por %p180, %p181
      %s184 = sadd.s32 %s183, 1
      %p187 = scmp.eq.s32.totalorder %s23, 1
      %p188 = scmp.ne.s32.totalorder %s183, %s185
      %p189 = scmp.eq.s32.totalorder %s23, 0
      %p190 = por %p188, %p189
      %p191 = scmp.ne.s32.totalorder %s183, %s185
      %p192 = scmp.eq.s32.totalorder %s28, 1
      %p193 = por %p191, %p192
      %p194 = scmp.ne.s32.totalorder %s185, %s186
      %p195 = scmp.eq.s32.totalorder %s28, 0
      %p196 = por %p194, %p195
      %p197 = scmp.ne.s32.totalorder %s185, %s186
      %p198 = scmp.eq.s32.totalorder %s29, 1
      %p199 = por %p197, %p198
      %p201 = scmp.ne.s32.totalorder %s186, %s200
      %p202 = scmp.eq.s32.totalorder %s29, 0
      %p203 = por %p201, %p202
      %s205 = sadd.s32 %s204, 1
      %p208 = scmp.eq.s32.totalorder %s23, 1
      %p209 = scmp.ne.s32.totalorder %s204, %s206
      %p210 = scmp.eq.s32.totalorder %s23, 0
      %p211 = por %p209, %p210
      %p212 = scmp.ne.s32.totalorder %s204, %s206
      %p213 = scmp.eq.s32.totalorder %s28, 1
      %p214 = por %p212, %p213
      %p215 = scmp.ne.s32.totalorder %s206, %s207
      %p216 = scmp.eq.s32.totalorder %s28, 0
      %p217 = por %p215, %p216
      %p218 = scmp.ne.s32.totalorder %s206, %s207
      %p219 = scmp.eq.s32.totalorder %s29, 1
      %p220 = por %p218, %p219
      %p222 = scmp.ne.s32.totalorder %s207, %s221
      %p223 = scmp.eq.s32.totalorder %s29, 0
      %p224 = por %p222, %p223
      %s226 = sadd.s32 %s225, 1
      %p229 = scmp.eq.s32.totalorder %s23, 1
      %p230 = scmp.ne.s32.totalorder %s225, %s227
      %p231 = scmp.eq.s32.totalorder %s23, 0
      %p232 = por %p230, %p231
      %p233 = scmp.ne.s32.totalorder %s225, %s227
      %p234 = scmp.eq.s32.totalorder %s28, 1
      %p235 = por %p233, %p234
      %p236 = scmp.ne.s32.totalorder %s227, %s228
      %p237 = scmp.eq.s32.totalorder %s28, 0
      %p238 = por %p236, %p237
      %p239 = scmp.ne.s32.totalorder %s227, %s228
      %p240 = scmp.eq.s32.totalorder %s29, 1
      %p241 = por %p239, %p240
      %p243 = scmp.ne.s32.totalorder %s228, %s242
      %p244 = scmp.eq.s32.totalorder %s29, 0
      %p245 = por %p243, %p244
      %s246 = ssub.s32 %s23, %s30
      %p247 = scmp.eq.s32.totalorder %s246, 0
      %s249 = sadd.s32 %s248, 1
      %s250 = scalar_select %p247, %s248, %s249
      %p253 = pneg %p247
      %p254 = scmp.eq.s32.totalorder %s23, 1
      %p255 = por %p253, %p254
      %p256 = scmp.ne.s32.totalorder %s248, %s251
      %p257 = scmp.eq.s32.totalorder %s23, 0
      %p258 = por %p256, %p257
      %p259 = scmp.ne.s32.totalorder %s248, %s251
      %p260 = scmp.eq.s32.totalorder %s28, 1
      %p261 = por %p259, %p260
      %p262 = scmp.ne.s32.totalorder %s251, %s252
      %p263 = scmp.eq.s32.totalorder %s28, 0
      %p264 = por %p262, %p263
      %p265 = scmp.ne.s32.totalorder %s251, %s252
      %p266 = scmp.eq.s32.totalorder %s29, 1
      %p267 = por %p265, %p266
      %p269 = scmp.ne.s32.totalorder %s252, %s268
      %p270 = scmp.eq.s32.totalorder %s29, 0
      %p271 = por %p269, %p270
      %p272 = scmp.le.s32.totalorder 1, %s23
      %p273 = scmp.lt.s32.totalorder %s23, 3
      %p274 = pnand %p272, %p273
      %p275 = pneg %p274
      // Predicated region
      $region9: #{tpu_custom_call.1} parent=5 // pred_check
        _
      $region10: #{tpu_custom_call.1} parent=5 // pred_check_branch
        %277 = sbr.rel (%p274) target = $region12
      $region11: #{tpu_custom_call.1} parent=5 // pred_region
        %s278 = ssub.s32 %s23, 1
        // Predicated region
        $region13: #{tpu_custom_call.1} parent=11 // pred_check
          %p279 = pneg %p70
        $region14: #{tpu_custom_call.1} parent=11 // pred_check_branch
          %281 = sbr.rel (%p279) target = $region16
        $region15: #{tpu_custom_call.1} parent=11 // pred_region
          %s283 = ssub.s32 512, 512
          %284 = vsyncadd [#allocation6], %s283
          %s285 = sshll.u32 [#allocation5], 4
          %s286 = int_to_ptr.vmem [resolvable:$true] %s285
          %291 = dma.hbm_to_vmem [thread:$0]  %s1, 512, %s286, [#allocation6], 256, 256, 16
        $region16: #{tpu_custom_call.1} parent=11 // pred_fallthru
          _
        // Predicated region
        $region17: #{tpu_custom_call.1} parent=11 // pred_check
          %p292 = pneg %p91
        $region18: #{tpu_custom_call.1} parent=11 // pred_check_branch
          %294 = sbr.rel (%p292) target = $region20
        $region19: #{tpu_custom_call.1} parent=11 // pred_region
          _
        $region20: #{tpu_custom_call.1} parent=11 // pred_fallthru
          _
        // Predicated region
        $region21: #{tpu_custom_call.1} parent=11 // pred_check
          %p295 = pneg %p112
        $region22: #{tpu_custom_call.1} parent=11 // pred_check_branch
          %297 = sbr.rel (%p295) target = $region24
        $region23: #{tpu_custom_call.1} parent=11 // pred_region
          _
        $region24: #{tpu_custom_call.1} parent=11 // pred_fallthru
          _
        // Predicated region
        $region25: #{tpu_custom_call.1} parent=11 // pred_check
          %p298 = pneg %p133
        $region26: #{tpu_custom_call.1} parent=11 // pred_check_branch
          %300 = sbr.rel (%p298) target = $region28
        $region27: #{tpu_custom_call.1} parent=11 // pred_region
          _
        $region28: #{tpu_custom_call.1} parent=11 // pred_fallthru
          _
        // Predicated region
        $region29: #{tpu_custom_call.1} parent=11 // pred_check
          %p301 = pneg %p154
        $region30: #{tpu_custom_call.1} parent=11 // pred_check_branch
          %303 = sbr.rel (%p301) target = $region32
        $region31: #{tpu_custom_call.1} parent=11 // pred_region
          _
        $region32: #{tpu_custom_call.1} parent=11 // pred_fallthru
          _
        // Predicated region
        $region33: #{tpu_custom_call.1} parent=11 // pred_check
          %p304 = pneg %p175
        $region34: #{tpu_custom_call.1} parent=11 // pred_check_branch
          %306 = sbr.rel (%p304) target = $region36
        $region35: #{tpu_custom_call.1} parent=11 // pred_region
          _
        $region36: #{tpu_custom_call.1} parent=11 // pred_fallthru
          _
        // Predicated region
        $region37: #{tpu_custom_call.1} parent=11 // pred_check
          %p307 = pneg %p196
        $region38: #{tpu_custom_call.1} parent=11 // pred_check_branch
          %309 = sbr.rel (%p307) target = $region40
        $region39: #{tpu_custom_call.1} parent=11 // pred_region
          _
        $region40: #{tpu_custom_call.1} parent=11 // pred_fallthru
          _
        // Predicated region
        $region41: #{tpu_custom_call.1} parent=11 // pred_check
          %p310 = pneg %p217
        $region42: #{tpu_custom_call.1} parent=11 // pred_check_branch
          %312 = sbr.rel (%p310) target = $region44
        $region43: #{tpu_custom_call.1} parent=11 // pred_region
          _
        $region44: #{tpu_custom_call.1} parent=11 // pred_fallthru
          _
        // Predicated region
        $region45: #{tpu_custom_call.1} parent=11 // pred_check
          %p313 = pneg %p238
        $region46: #{tpu_custom_call.1} parent=11 // pred_check_branch
          %315 = sbr.rel (%p313) target = $region48
        $region47: #{tpu_custom_call.1} parent=11 // pred_region
          _
        $region48: #{tpu_custom_call.1} parent=11 // pred_fallthru
          _
      $region12: #{tpu_custom_call.1} parent=5 // pred_fallthru
        _
      %p316 = scmp.lt.s32.totalorder %s23, 2
      // Predicated region
      $region49: #{tpu_custom_call.1} parent=5 // pred_check
        %p317 = pneg %p316
      $region50: #{tpu_custom_call.1} parent=5 // pred_check_branch
        %319 = sbr.rel (%p317) target = $region52
      $region51: #{tpu_custom_call.1} parent=5 // pred_region
        // Predicated region
        $region53: #{tpu_custom_call.1} parent=51 // pred_check
          %p320 = pneg %p43
        $region54: #{tpu_custom_call.1} parent=51 // pred_check_branch
          %322 = sbr.rel (%p320) target = $region56
        $region55: #{tpu_custom_call.1} parent=51 // pred_region
          %s323 = sand.u32 %s33, 1
          %s324 = scalar_lea.sflag [#allocation3], %s323
          %s325 = sand.u32 %s33, 1
          %s326 = smul.addr %s325, 16
          %s327 = scalar_lea.vmem [#allocation2], %s326
          %s329 = ssub.s32 256, 256
          %330 = vsyncadd %s324, %s329
          %s331 = smul.addr %s23, 2
          %s332 = smul.addr %s331, 128
          %s333 = scalar_lea.hbm %s0, %s332
          %s335 = sshll.u32 %s327, 4
          %s336 = int_to_ptr.vmem [resolvable:$true] %s335
          %338 = dma.hbm_to_vmem [thread:$0]  %s333, 256, %s336, %s324
        $region56: #{tpu_custom_call.1} parent=51 // pred_fallthru
          _
      $region52: #{tpu_custom_call.1} parent=5 // pred_fallthru
        _
      %p339 = scmp.le.s32.totalorder 1, %s23
      %p340 = scmp.lt.s32.totalorder %s23, 3
      %p341 = pnand %p339, %p340
      %p342 = pneg %p341
      // Predicated region
      $region57: #{tpu_custom_call.1} parent=5 // pred_check
        _
      $region58: #{tpu_custom_call.1} parent=5 // pred_check_branch
        %344 = sbr.rel (%p341) target = $region60
      $region59: #{tpu_custom_call.1} parent=5 // pred_region
        %s345 = ssub.s32 %s23, 1
        %s346 = sand.u32 %s36, 1
        %s347 = scalar_lea.sflag [#allocation3], %s346
        %s348 = sand.u32 %s36, 1
        %s349 = smul.addr %s348, 16
        %s350 = scalar_lea.vmem [#allocation2], %s349
        // Predicated region
        $region61: #{tpu_custom_call.1} parent=59 // pred_check
          %p351 = pneg %p49
        $region62: #{tpu_custom_call.1} parent=59 // pred_check_branch
          %353 = sbr.rel (%p351) target = $region64
        $region63: #{tpu_custom_call.1} parent=59 // pred_region
          %354 = dma.done %s347, 256
        $region64: #{tpu_custom_call.1} parent=59 // pred_fallthru
          _
        // Predicated region
        $region65: #{tpu_custom_call.1} parent=59 // pred_check
          %p355 = pneg %p70
        $region66: #{tpu_custom_call.1} parent=59 // pred_check_branch
          %357 = sbr.rel (%p355) target = $region68
        $region67: #{tpu_custom_call.1} parent=59 // pred_region
          %358 = dma.done [#allocation6], 512
        $region68: #{tpu_custom_call.1} parent=59 // pred_fallthru
          _
        %s359 = sand.u32 %s36, 1
        %s360 = scalar_lea.sflag [#allocation3], %s359
        %s361 = sand.u32 %s36, 1
        %s362 = smul.addr %s361, 16
        %s363 = scalar_lea.vmem [#allocation2], %s362
        %p364 = pneg %p49
        %p365 = pneg %p46
        %p366 = pneg %p70
        %p367 = pneg %p67
        %p368 = pneg %p91
        %p369 = pneg %p88
        %p370 = pneg %p112
        %p371 = pneg %p109
        %p372 = pneg %p133
        %p373 = pneg %p130
        %p374 = pneg %p154
        %p375 = pneg %p151
        %p376 = pneg %p175
        %p377 = pneg %p172
        %p378 = pneg %p196
        %p379 = pneg %p193
        %p380 = pneg %p217
        %p381 = pneg %p214
        %p382 = pneg %p238
        %p383 = pneg %p235
        %p384 = pneg %p264
        %p385 = pneg %p261
        %s386 = sand.u32 %s251, 1
        %s387 = scalar_lea.sflag [#allocation4], %s386
        %s388 = sand.u32 %s251, 1
        %s389 = smul.addr %s388, 16
        %s390 = scalar_lea.vmem [#allocation7], %s389
        %v391 = vld [vmem:[%s350] sm:$0xff]
        %v392 = vld [vmem:[%s350 + $0x8] sm:$0xff]
        %393 = vrot.lane.b32.xlu0 %v391, 17
        %v394 = vpop.permute.xlu0 %393
        %395 = vrot.lane.b32.xlu0 %v392, 17
        %v396 = vpop.permute.xlu0 %395
        %v397 = vlaneseq
        %v398 = vand.u32 %v397, 127
        %vm399 = vcmp.lt.s32.totalorder %v398, 17
        %v400 = vsel %vm399, %v394, %v396
        %v401 = vsel %vm399, %v396, %v394
        %v402 = vld [vmem:[#allocation5] ss:$8 sm:$0x3]
        %v404 = vlaneseq
        %v405 = vshrl.u32 %v404, 7
        %v406 = vsub.s32 0, %v405
        %v407 = vrot.slane %v402, %v406
        %v408 = vlaneseq
        %v409 = vshrl.u32 %v408, 7
        %v410 = vsub.s32 1, %v409
        %v411 = vrot.slane %v402, %v410
        %v414 = vmul.f32 %v401, %v407
        %v415 = vmul.f32 %v400, %v411
        %416 = vrot.lane.b32.xlu0 %v391, 16
        %v417 = vpop.permute.xlu0 %416
        %418 = vrot.lane.b32.xlu0 %v392, 16
        %v419 = vpop.permute.xlu0 %418
        %vm420 = vcmp.lt.s32.totalorder %v398, 16
        %v421 = vsel %vm420, %v417, %v419
        %v422 = vsel %vm420, %v419, %v417
        %s423 = scalar_lea.vmem [#allocation5], 1
        %v424 = vld [vmem:[%s423] ss:$8 sm:$0x3]
        %v426 = vlaneseq
        %v427 = vshrl.u32 %v426, 7
        %v428 = vsub.s32 0, %v427
        %v429 = vrot.slane %v424, %v428
        %v430 = vlaneseq
        %v431 = vshrl.u32 %v430, 7
        %v432 = vsub.s32 1, %v431
        %v433 = vrot.slane %v424, %v432
        %v436 = vmul.f32 %v422, %v429
        %v437 = vmul.f32 %v421, %v433
        %438 = vrot.lane.b32.xlu0 %v391, 15
        %v439 = vpop.permute.xlu0 %438
        %440 = vrot.lane.b32.xlu0 %v392, 15
        %v441 = vpop.permute.xlu0 %440
        %vm442 = vcmp.lt.s32.totalorder %v398, 15
        %v443 = vsel %vm442, %v439, %v441
        %v444 = vsel %vm442, %v441, %v439
        %s445 = scalar_lea.vmem [#allocation5], 2
        %v446 = vld [vmem:[%s445] ss:$8 sm:$0x3]
        %v448 = vlaneseq
        %v449 = vshrl.u32 %v448, 7
        %v450 = vsub.s32 0, %v449
        %v451 = vrot.slane %v446, %v450
        %v452 = vlaneseq
        %v453 = vshrl.u32 %v452, 7
        %v454 = vsub.s32 1, %v453
        %v455 = vrot.slane %v446, %v454
        %v458 = vmul.f32 %v444, %v451
        %v459 = vmul.f32 %v443, %v455
        %460 = vrot.lane.b32.xlu0 %v391, 1
        %v461 = vpop.permute.xlu0 %460
        %462 = vrot.lane.b32.xlu0 %v392, 1
        %v463 = vpop.permute.xlu0 %462
        %vm464 = vcmp.lt.s32.totalorder %v398, 1
        %v465 = vsel %vm464, %v461, %v463
        %v466 = vsel %vm464, %v463, %v461
        %s467 = scalar_lea.vmem [#allocation5], 3
        %v468 = vld [vmem:[%s467] ss:$8 sm:$0x3]
        %v470 = vlaneseq
        %v471 = vshrl.u32 %v470, 7
        %v472 = vsub.s32 0, %v471
        %v473 = vrot.slane %v468, %v472
        %v474 = vlaneseq
        %v475 = vshrl.u32 %v474, 7
        %v476 = vsub.s32 1, %v475
        %v477 = vrot.slane %v468, %v476
        %v480 = vmul.f32 %v466, %v473
        %v481 = vmul.f32 %v465, %v477
        %482 = vrot.lane.b32.xlu0 %v391, 127
        %v483 = vpop.permute.xlu0 %482
        %484 = vrot.lane.b32.xlu0 %v392, 127
        %v485 = vpop.permute.xlu0 %484
        %vm486 = vcmp.lt.s32.totalorder %v398, 127
        %v487 = vsel %vm486, %v483, %v485
        %v488 = vsel %vm486, %v485, %v483
        %s489 = scalar_lea.vmem [#allocation5], 5
        %v490 = vld [vmem:[%s489] ss:$8 sm:$0x3]
        %v492 = vlaneseq
        %v493 = vshrl.u32 %v492, 7
        %v494 = vsub.s32 0, %v493
        %v495 = vrot.slane %v490, %v494
        %v496 = vlaneseq
        %v497 = vshrl.u32 %v496, 7
        %v498 = vsub.s32 1, %v497
        %v499 = vrot.slane %v490, %v498
        %v502 = vmul.f32 %v487, %v495
        %v503 = vmul.f32 %v488, %v499
        %504 = vrot.lane.b32.xlu0 %v391, 113
        %v505 = vpop.permute.xlu0 %504
        %506 = vrot.lane.b32.xlu0 %v392, 113
        %v507 = vpop.permute.xlu0 %506
        %vm508 = vcmp.lt.s32.totalorder %v398, 113
        %v509 = vsel %vm508, %v505, %v507
        %v510 = vsel %vm508, %v507, %v505
        %s511 = scalar_lea.vmem [#allocation5], 6
        %v512 = vld [vmem:[%s511] ss:$8 sm:$0x3]
        %v514 = vlaneseq
        %v515 = vshrl.u32 %v514, 7
        %v516 = vsub.s32 0, %v515
        %v517 = vrot.slane %v512, %v516
        %v518 = vlaneseq
        %v519 = vshrl.u32 %v518, 7
        %v520 = vsub.s32 1, %v519
        %v521 = vrot.slane %v512, %v520
        %v524 = vmul.f32 %v509, %v517
        %v525 = vmul.f32 %v510, %v521
        %526 = vrot.lane.b32.xlu0 %v391, 112
        %v527 = vpop.permute.xlu0 %526
        %528 = vrot.lane.b32.xlu0 %v392, 112
        %v529 = vpop.permute.xlu0 %528
        %vm530 = vcmp.lt.s32.totalorder %v398, 112
        %v531 = vsel %vm530, %v527, %v529
        %v532 = vsel %vm530, %v529, %v527
        %s533 = scalar_lea.vmem [#allocation5], 7
        %v534 = vld [vmem:[%s533] ss:$8 sm:$0x3]
        %v536 = vlaneseq
        %v537 = vshrl.u32 %v536, 7
        %v538 = vsub.s32 0, %v537
        %v539 = vrot.slane %v534, %v538
        %v540 = vlaneseq
        %v541 = vshrl.u32 %v540, 7
        %v542 = vsub.s32 1, %v541
        %v543 = vrot.slane %v534, %v542
        %v546 = vmul.f32 %v531, %v539
        %v547 = vmul.f32 %v532, %v543
        %548 = vrot.lane.b32.xlu0 %v391, 111
        %v549 = vpop.permute.xlu0 %548
        %550 = vrot.lane.b32.xlu0 %v392, 111
        %v551 = vpop.permute.xlu0 %550
        %vm552 = vcmp.lt.s32.totalorder %v398, 111
        %v553 = vsel %vm552, %v549, %v551
        %v554 = vsel %vm552, %v551, %v549
        %s555 = scalar_lea.vmem [#allocation5], 16
        %v556 = vld [vmem:[%s555] ss:$8 sm:$0x3]
        %v558 = vlaneseq
        %v559 = vshrl.u32 %v558, 7
        %v560 = vsub.s32 0, %v559
        %v561 = vrot.slane %v556, %v560
        %v562 = vlaneseq
        %v563 = vshrl.u32 %v562, 7
        %v564 = vsub.s32 1, %v563
        %v565 = vrot.slane %v556, %v564
        %v568 = vmul.f32 %v553, %v561
        %v569 = vmul.f32 %v554, %v565
        %v570 = vld [vmem:[%s2] sm:$0xf]
        %v571 = vld [vmem:[%s3] sm:$0xf]
        %573 = vset.pattern.permute.xlu0 0
        %574 = vperm.xlu0 %573, %v571
        %v575 = vpop.permute.xlu0 %574
        %vm577 = vcmask 588800
        %v579 = vsel %vm577, %v570, 0
        %581 = vmatprep.subr.mxu0 0.0
        %582 = vmatpush1.msra.mxu0 0.0
        %583 = vmatprep.subr.mxu0 0.0
        %584 = vmatpush1.msra.mxu0 0.0
        %585 = vmatprep.subr.mxu0 0.0
        %586 = vmatpush1.msra.mxu0 0.0
        %587 = vmatprep.subr.mxu0 0.0
        %588 = vmatpush1.msra.mxu0 0.0
        %589 = vmatprep.subr.mxu0 0.0
        %590 = vmatpush1.msra.mxu0 0.0
        %591 = vmatprep.subr.mxu0 0.0
        %592 = vmatpush1.msra.mxu0 0.0
        %593 = vmatprep.subr.mxu0 0.0
        %594 = vmatpush1.msra.mxu0 0.0
        %595 = vmatprep.subr.mxu0 %v569
        %596 = vmatpush1.msra.mxu0 %v568
        %597 = vmatprep.subr.mxu0 %v547
        %598 = vmatpush1.msra.mxu0 %v546
        %599 = vmatprep.subr.mxu0 %v525
        %600 = vmatpush1.msra.mxu0 %v524
        %601 = vmatprep.subr.mxu0 %v503
        %602 = vmatpush1.msra.mxu0 %v502
        %603 = vmatprep.subr.mxu0 %v392
        %604 = vmatpush1.msra.mxu0 %v391
        %605 = vmatprep.subr.mxu0 %v481
        %606 = vmatpush1.msra.mxu0 %v480
        %607 = vmatprep.subr.mxu0 %v459
        %608 = vmatpush1.msra.mxu0 %v458
        %609 = vmatprep.subr.mxu0 %v437
        %610 = vmatpush1.msra.mxu0 %v436
        %611 = vmatprep.subr.mxu0 %v415
        %612 = vmatpush1.msra.mxu0 %v414
        %613 = vmatprep.subr.mxu0 0.0
        %614 = vmatpush2.msra.mxu0 0.0
        %615 = vmatprep.subr.mxu0 0.0
        %616 = vmatpush2.msra.mxu0 0.0
        %617 = vmatprep.subr.mxu0 0.0
        %618 = vmatpush2.msra.mxu0 0.0
        %619 = vmatprep.subr.mxu0 0.0
        %620 = vmatpush2.msra.mxu0 0.0
        %621 = vmatprep.subr.mxu0 0.0
        %622 = vmatpush2.msra.mxu0 0.0
        %623 = vmatprep.subr.mxu0 0.0
        %624 = vmatpush2.msra.mxu0 0.0
        %625 = vmatprep.subr.mxu0 0.0
        %626 = vmatpush2.msra.mxu0 0.0
        %627 = vmatprep.subr.mxu0 0.0
        %628 = vmatpush2.msra.mxu0 0.0
        %629 = vmatprep.subr.mxu0 0.0
        %630 = vmatpush2.msra.mxu0 0.0
        %631 = vmatprep.subr.mxu0 0.0
        %632 = vmatpush2.msra.mxu0 0.0
        %633 = vmatprep.subr.mxu0 0.0
        %634 = vmatpush2.msra.mxu0 0.0
        %635 = vmatprep.subr.mxu0 0.0
        %636 = vmatpush2.msra.mxu0 0.0
        %637 = vmatprep.subr.mxu0 0.0
        %638 = vmatpush2.msra.mxu0 0.0
        %639 = vmatprep.subr.mxu0 0.0
        %640 = vmatpush2.msra.mxu0 0.0
        %641 = vmatprep.subr.mxu0 0.0
        %642 = vmatpush2.msra.mxu0 0.0
        %643 = vmatprep.subr.mxu0 0.0
        %644 = vmatpush2.msra.mxu0 0.0
        %645 = vmatprep.mubr.f32.mxu0 0.0
        %646 = vmatmul.mubr.f32.gmra.mxu0 %v579
        %v647 = vpop.f32.mrf.mxu0
        %v648 = vadd.f32 %v575, %v647
        %v649 = vpop.f32.mrf.mxu0
        %v650 = vadd.f32 %v575, %v649
        %651 = vdwg.mxu0
        %v652 = vld [vmem:[%s4] sm:$0xf]
        %653 = vrot.lane.b32.xlu0 %v648, 17
        %v654 = vpop.permute.xlu0 %653
        %655 = vrot.lane.b32.xlu0 %v650, 17
        %v656 = vpop.permute.xlu0 %655
        %v657 = vsel %vm399, %v654, %v656
        %v658 = vsel %vm399, %v656, %v654
        %v659 = vmul.f32 %v658, %v407
        %v660 = vmul.f32 %v657, %v411
        %661 = vrot.lane.b32.xlu0 %v648, 16
        %v662 = vpop.permute.xlu0 %661
        %663 = vrot.lane.b32.xlu0 %v650, 16
        %v664 = vpop.permute.xlu0 %663
        %v665 = vsel %vm420, %v662, %v664
        %v666 = vsel %vm420, %v664, %v662
        %v667 = vmul.f32 %v666, %v429
        %v668 = vmul.f32 %v665, %v433
        %669 = vrot.lane.b32.xlu0 %v648, 15
        %v670 = vpop.permute.xlu0 %669
        %671 = vrot.lane.b32.xlu0 %v650, 15
        %v672 = vpop.permute.xlu0 %671
        %v673 = vsel %vm442, %v670, %v672
        %v674 = vsel %vm442, %v672, %v670
        %v675 = vmul.f32 %v674, %v451
        %v676 = vmul.f32 %v673, %v455
        %677 = vrot.lane.b32.xlu0 %v648, 1
        %v678 = vpop.permute.xlu0 %677
        %679 = vrot.lane.b32.xlu0 %v650, 1
        %v680 = vpop.permute.xlu0 %679
        %v681 = vsel %vm464, %v678, %v680
        %v682 = vsel %vm464, %v680, %v678
        %v683 = vmul.f32 %v682, %v473
        %v684 = vmul.f32 %v681, %v477
        %685 = vrot.lane.b32.xlu0 %v648, 127
        %v686 = vpop.permute.xlu0 %685
        %687 = vrot.lane.b32.xlu0 %v650, 127
        %v688 = vpop.permute.xlu0 %687
        %v689 = vsel %vm486, %v686, %v688
        %v690 = vsel %vm486, %v688, %v686
        %v691 = vmul.f32 %v689, %v495
        %v692 = vmul.f32 %v690, %v499
        %693 = vrot.lane.b32.xlu0 %v648, 113
        %v694 = vpop.permute.xlu0 %693
        %695 = vrot.lane.b32.xlu0 %v650, 113
        %v696 = vpop.permute.xlu0 %695
        %v697 = vsel %vm508, %v694, %v696
        %v698 = vsel %vm508, %v696, %v694
        %v699 = vmul.f32 %v697, %v517
        %v700 = vmul.f32 %v698, %v521
        %701 = vrot.lane.b32.xlu0 %v648, 112
        %v702 = vpop.permute.xlu0 %701
        %703 = vrot.lane.b32.xlu0 %v650, 112
        %v704 = vpop.permute.xlu0 %703
        %v705 = vsel %vm530, %v702, %v704
        %v706 = vsel %vm530, %v704, %v702
        %v707 = vmul.f32 %v705, %v539
        %v708 = vmul.f32 %v706, %v543
        %709 = vrot.lane.b32.xlu0 %v648, 111
        %v710 = vpop.permute.xlu0 %709
        %711 = vrot.lane.b32.xlu0 %v650, 111
        %v712 = vpop.permute.xlu0 %711
        %v713 = vsel %vm552, %v710, %v712
        %v714 = vsel %vm552, %v712, %v710
        %v715 = vmul.f32 %v713, %v561
        %v716 = vmul.f32 %v714, %v565
        %718 = vset.pattern.permute.xlu0 0
        %719 = vperm.xlu0 %718, %v652
        %v720 = vpop.permute.xlu0 %719
        %v722 = vmul.f32 %v720, %v659
        %v723 = vmul.f32 %v720, %v660
        %724 = vset.pattern.permute.xlu0 1
        %725 = vperm.xlu0 %724, %v652
        %v726 = vpop.permute.xlu0 %725
        %v728 = vmul.f32 %v726, %v667
        %v729 = vmul.f32 %v726, %v668
        %v730 = vadd.f32 %v722, %v728
        %v731 = vadd.f32 %v723, %v729
        %732 = vset.pattern.permute.xlu0 2
        %733 = vperm.xlu0 %732, %v652
        %v734 = vpop.permute.xlu0 %733
        %v736 = vmul.f32 %v734, %v675
        %v737 = vmul.f32 %v734, %v676
        %v738 = vadd.f32 %v730, %v736
        %v739 = vadd.f32 %v731, %v737
        %740 = vset.pattern.permute.xlu0 3
        %741 = vperm.xlu0 %740, %v652
        %v742 = vpop.permute.xlu0 %741
        %v744 = vmul.f32 %v742, %v683
        %v745 = vmul.f32 %v742, %v684
        %746 = vset.pattern.permute.xlu0 4
        %747 = vperm.xlu0 %746, %v652
        %v748 = vpop.permute.xlu0 %747
        %v750 = vmul.f32 %v748, %v648
        %v751 = vmul.f32 %v748, %v650
        %v752 = vadd.f32 %v744, %v750
        %v753 = vadd.f32 %v745, %v751
        %754 = vset.pattern.permute.xlu0 5
        %755 = vperm.xlu0 %754, %v652
        %v756 = vpop.permute.xlu0 %755
        %v758 = vmul.f32 %v756, %v691
        %v759 = vmul.f32 %v756, %v692
        %v760 = vadd.f32 %v752, %v758
        %v761 = vadd.f32 %v753, %v759
        %762 = vset.pattern.permute.xlu0 6
        %763 = vperm.xlu0 %762, %v652
        %v764 = vpop.permute.xlu0 %763
        %v766 = vmul.f32 %v764, %v699
        %v767 = vmul.f32 %v764, %v700
        %768 = vset.pattern.permute.xlu0 7
        %769 = vperm.xlu0 %768, %v652
        %v770 = vpop.permute.xlu0 %769
        %v772 = vmul.f32 %v770, %v707
        %v773 = vmul.f32 %v770, %v708
        %v774 = vadd.f32 %v766, %v772
        %v775 = vadd.f32 %v767, %v773
        %776 = vset.pattern.permute.xlu0 8
        %777 = vperm.xlu0 %776, %v652
        %v778 = vpop.permute.xlu0 %777
        %v780 = vmul.f32 %v778, %v715
        %v781 = vmul.f32 %v778, %v716
        %v782 = vadd.f32 %v774, %v780
        %v783 = vadd.f32 %v775, %v781
        %v784 = vadd.f32 %v738, %v760
        %v785 = vadd.f32 %v739, %v761
        %v786 = vld [vmem:[%s5] sm:$0xf]
        %788 = vset.pattern.permute.xlu0 0
        %789 = vperm.xlu0 %788, %v786
        %v790 = vpop.permute.xlu0 %789
        %v792 = vadd.f32 %v782, %v790
        %v793 = vadd.f32 %v783, %v790
        %v794 = vadd.f32 %v784, %v792
        %v795 = vadd.f32 %v785, %v793
        %v796 = vmax.f32 %v794, 0.0
        %v797 = vmax.f32 %v795, 0.0
        %v798 = vmax.f32 %v659, 0.0
        %v799 = vmax.f32 %v660, 0.0
        %800 = vrot.lane.b32.xlu0 %v796, 17
        %v801 = vpop.permute.xlu0 %800
        %802 = vrot.lane.b32.xlu0 %v797, 17
        %v803 = vpop.permute.xlu0 %802
        %v804 = vsel %vm399, %v801, %v803
        %v805 = vsel %vm399, %v803, %v801
        %v806 = vmul.f32 %v805, %v407
        %v807 = vmul.f32 %v804, %v411
        %v810 = vrot.slane %v806, 4
        %v811 = vrot.slane %v807, 4
        %vm814 = vcmask 1043456
        %v815 = vsel %vm814, %v798, %v810
        %v816 = vsel %vm814, %v799, %v811
        %v817 = vmax.f32 %v667, 0.0
        %v818 = vmax.f32 %v668, 0.0
        %819 = vrot.lane.b32.xlu0 %v796, 16
        %v820 = vpop.permute.xlu0 %819
        %821 = vrot.lane.b32.xlu0 %v797, 16
        %v822 = vpop.permute.xlu0 %821
        %v823 = vsel %vm420, %v820, %v822
        %v824 = vsel %vm420, %v822, %v820
        %v825 = vmul.f32 %v824, %v429
        %v826 = vmul.f32 %v823, %v433
        %v829 = vrot.slane %v825, 4
        %v830 = vrot.slane %v826, 4
        %v833 = vsel %vm814, %v817, %v829
        %v834 = vsel %vm814, %v818, %v830
        %v835 = vmax.f32 %v675, 0.0
        %v836 = vmax.f32 %v676, 0.0
        %837 = vrot.lane.b32.xlu0 %v796, 15
        %v838 = vpop.permute.xlu0 %837
        %839 = vrot.lane.b32.xlu0 %v797, 15
        %v840 = vpop.permute.xlu0 %839
        %v841 = vsel %vm442, %v838, %v840
        %v842 = vsel %vm442, %v840, %v838
        %v843 = vmul.f32 %v842, %v451
        %v844 = vmul.f32 %v841, %v455
        %v847 = vrot.slane %v843, 4
        %v848 = vrot.slane %v844, 4
        %v851 = vsel %vm814, %v835, %v847
        %v852 = vsel %vm814, %v836, %v848
        %v853 = vmax.f32 %v683, 0.0
        %v854 = vmax.f32 %v684, 0.0
        %855 = vrot.lane.b32.xlu0 %v796, 1
        %v856 = vpop.permute.xlu0 %855
        %857 = vrot.lane.b32.xlu0 %v797, 1
        %v858 = vpop.permute.xlu0 %857
        %v859 = vsel %vm464, %v856, %v858
        %v860 = vsel %vm464, %v858, %v856
        %v861 = vmul.f32 %v860, %v473
        %v862 = vmul.f32 %v859, %v477
        %v865 = vrot.slane %v861, 4
        %v866 = vrot.slane %v862, 4
        %v869 = vsel %vm814, %v853, %v865
        %v870 = vsel %vm814, %v854, %v866
        %v871 = vmax.f32 %v648, 0.0
        %v872 = vmax.f32 %v650, 0.0
        %v875 = vrot.slane %v796, 4
        %v876 = vrot.slane %v797, 4
        %v879 = vsel %vm814, %v871, %v875
        %v880 = vsel %vm814, %v872, %v876
        %v881 = vmax.f32 %v691, 0.0
        %v882 = vmax.f32 %v692, 0.0
        %883 = vrot.lane.b32.xlu0 %v796, 127
        %v884 = vpop.permute.xlu0 %883
        %885 = vrot.lane.b32.xlu0 %v797, 127
        %v886 = vpop.permute.xlu0 %885
        %v887 = vsel %vm486, %v884, %v886
        %v888 = vsel %vm486, %v886, %v884
        %v889 = vmul.f32 %v887, %v495
        %v890 = vmul.f32 %v888, %v499
        %v893 = vrot.slane %v889, 4
        %v894 = vrot.slane %v890, 4
        %v897 = vsel %vm814, %v881, %v893
        %v898 = vsel %vm814, %v882, %v894
        %v899 = vmax.f32 %v699, 0.0
        %v900 = vmax.f32 %v700, 0.0
        %901 = vrot.lane.b32.xlu0 %v796, 113
        %v902 = vpop.permute.xlu0 %901
        %903 = vrot.lane.b32.xlu0 %v797, 113
        %v904 = vpop.permute.xlu0 %903
        %v905 = vsel %vm508, %v902, %v904
        %v906 = vsel %vm508, %v904, %v902
        %v907 = vmul.f32 %v905, %v517
        %v908 = vmul.f32 %v906, %v521
        %v911 = vrot.slane %v907, 4
        %v912 = vrot.slane %v908, 4
        %v915 = vsel %vm814, %v899, %v911
        %v916 = vsel %vm814, %v900, %v912
        %v917 = vmax.f32 %v707, 0.0
        %v918 = vmax.f32 %v708, 0.0
        %919 = vrot.lane.b32.xlu0 %v796, 112
        %v920 = vpop.permute.xlu0 %919
        %921 = vrot.lane.b32.xlu0 %v797, 112
        %v922 = vpop.permute.xlu0 %921
        %v923 = vsel %vm530, %v920, %v922
        %v924 = vsel %vm530, %v922, %v920
        %v925 = vmul.f32 %v923, %v539
        %v926 = vmul.f32 %v924, %v543
        %v929 = vrot.slane %v925, 4
        %v930 = vrot.slane %v926, 4
        %v933 = vsel %vm814, %v917, %v929
        %v934 = vsel %vm814, %v918, %v930
        %v935 = vmax.f32 %v715, 0.0
        %v936 = vmax.f32 %v716, 0.0
        %937 = vrot.lane.b32.xlu0 %v796, 111
        %v938 = vpop.permute.xlu0 %937
        %939 = vrot.lane.b32.xlu0 %v797, 111
        %v940 = vpop.permute.xlu0 %939
        %v941 = vsel %vm552, %v938, %v940
        %v942 = vsel %vm552, %v940, %v938
        %v943 = vmul.f32 %v941, %v561
        %v944 = vmul.f32 %v942, %v565
        %v947 = vrot.slane %v943, 4
        %v948 = vrot.slane %v944, 4
        %v951 = vsel %vm814, %v935, %v947
        %v952 = vsel %vm814, %v936, %v948
        %v953 = vld [vmem:[%s6] sm:$0xf]
        %v954 = vld [vmem:[%s7] sm:$0xf]
        %956 = vset.pattern.permute.xlu0 0
        %957 = vperm.xlu0 %956, %v954
        %v958 = vpop.permute.xlu0 %957
        %v961 = vsel %vm577, %v953, 0
        %963 = vmatprep.subr.mxu0 0.0
        %964 = vmatpush1.msra.mxu0 0.0
        %965 = vmatprep.subr.mxu0 0.0
        %966 = vmatpush1.msra.mxu0 0.0
        %967 = vmatprep.subr.mxu0 0.0
        %968 = vmatpush1.msra.mxu0 0.0
        %969 = vmatprep.subr.mxu0 0.0
        %970 = vmatpush1.msra.mxu0 0.0
        %971 = vmatprep.subr.mxu0 0.0
        %972 = vmatpush1.msra.mxu0 0.0
        %973 = vmatprep.subr.mxu0 0.0
        %974 = vmatpush1.msra.mxu0 0.0
        %975 = vmatprep.subr.mxu0 0.0
        %976 = vmatpush1.msra.mxu0 0.0
        %977 = vmatprep.subr.mxu0 %v952
        %978 = vmatpush1.msra.mxu0 %v951
        %979 = vmatprep.subr.mxu0 %v934
        %980 = vmatpush1.msra.mxu0 %v933
        %981 = vmatprep.subr.mxu0 %v916
        %982 = vmatpush1.msra.mxu0 %v915
        %983 = vmatprep.subr.mxu0 %v898
        %984 = vmatpush1.msra.mxu0 %v897
        %985 = vmatprep.subr.mxu0 %v880
        %986 = vmatpush1.msra.mxu0 %v879
        %987 = vmatprep.subr.mxu0 %v870
        %988 = vmatpush1.msra.mxu0 %v869
        %989 = vmatprep.subr.mxu0 %v852
        %990 = vmatpush1.msra.mxu0 %v851
        %991 = vmatprep.subr.mxu0 %v834
        %992 = vmatpush1.msra.mxu0 %v833
        %993 = vmatprep.subr.mxu0 %v816
        %994 = vmatpush1.msra.mxu0 %v815
        %995 = vmatprep.subr.mxu0 0.0
        %996 = vmatpush2.msra.mxu0 0.0
        %997 = vmatprep.subr.mxu0 0.0
        %998 = vmatpush2.msra.mxu0 0.0
        %999 = vmatprep.subr.mxu0 0.0
        %1000 = vmatpush2.msra.mxu0 0.0
        %1001 = vmatprep.subr.mxu0 0.0
        %1002 = vmatpush2.msra.mxu0 0.0
        %1003 = vmatprep.subr.mxu0 0.0
        %1004 = vmatpush2.msra.mxu0 0.0
        %1005 = vmatprep.subr.mxu0 0.0
        %1006 = vmatpush2.msra.mxu0 0.0
        %1007 = vmatprep.subr.mxu0 0.0
        %1008 = vmatpush2.msra.mxu0 0.0
        %1009 = vmatprep.subr.mxu0 0.0
        %1010 = vmatpush2.msra.mxu0 0.0
        %1011 = vmatprep.subr.mxu0 0.0
        %1012 = vmatpush2.msra.mxu0 0.0
        %1013 = vmatprep.subr.mxu0 0.0
        %1014 = vmatpush2.msra.mxu0 0.0
        %1015 = vmatprep.subr.mxu0 0.0
        %1016 = vmatpush2.msra.mxu0 0.0
        %1017 = vmatprep.subr.mxu0 0.0
        %1018 = vmatpush2.msra.mxu0 0.0
        %1019 = vmatprep.subr.mxu0 0.0
        %1020 = vmatpush2.msra.mxu0 0.0
        %1021 = vmatprep.subr.mxu0 0.0
        %1022 = vmatpush2.msra.mxu0 0.0
        %1023 = vmatprep.subr.mxu0 0.0
        %1024 = vmatpush2.msra.mxu0 0.0
        %1025 = vmatprep.subr.mxu0 0.0
        %1026 = vmatpush2.msra.mxu0 0.0
        %1027 = vmatprep.mubr.f32.mxu0 0.0
        %1028 = vmatmul.mubr.f32.gmra.mxu0 %v961
        %v1029 = vpop.f32.mrf.mxu0
        %v1030 = vadd.f32 %v958, %v1029
        %v1031 = vpop.f32.mrf.mxu0
        %v1032 = vadd.f32 %v958, %v1031
        %1033 = vdwg.mxu0
        %v1034 = vld [vmem:[%s8] sm:$0xf]
        %1035 = vrot.lane.b32.xlu0 %v1030, 17
        %v1036 = vpop.permute.xlu0 %1035
        %1037 = vrot.lane.b32.xlu0 %v1032, 17
        %v1038 = vpop.permute.xlu0 %1037
        %v1039 = vsel %vm399, %v1036, %v1038
        %v1040 = vsel %vm399, %v1038, %v1036
        %v1041 = vmul.f32 %v1040, %v407
        %v1042 = vmul.f32 %v1039, %v411
        %1043 = vrot.lane.b32.xlu0 %v1030, 16
        %v1044 = vpop.permute.xlu0 %1043
        %1045 = vrot.lane.b32.xlu0 %v1032, 16
        %v1046 = vpop.permute.xlu0 %1045
        %v1047 = vsel %vm420, %v1044, %v1046
        %v1048 = vsel %vm420, %v1046, %v1044
        %v1049 = vmul.f32 %v1048, %v429
        %v1050 = vmul.f32 %v1047, %v433
        %1051 = vrot.lane.b32.xlu0 %v1030, 15
        %v1052 = vpop.permute.xlu0 %1051
        %1053 = vrot.lane.b32.xlu0 %v1032, 15
        %v1054 = vpop.permute.xlu0 %1053
        %v1055 = vsel %vm442, %v1052, %v1054
        %v1056 = vsel %vm442, %v1054, %v1052
        %v1057 = vmul.f32 %v1056, %v451
        %v1058 = vmul.f32 %v1055, %v455
        %1059 = vrot.lane.b32.xlu0 %v1030, 1
        %v1060 = vpop.permute.xlu0 %1059
        %1061 = vrot.lane.b32.xlu0 %v1032, 1
        %v1062 = vpop.permute.xlu0 %1061
        %v1063 = vsel %vm464, %v1060, %v1062
        %v1064 = vsel %vm464, %v1062, %v1060
        %v1065 = vmul.f32 %v1064, %v473
        %v1066 = vmul.f32 %v1063, %v477
        %1067 = vrot.lane.b32.xlu0 %v1030, 127
        %v1068 = vpop.permute.xlu0 %1067
        %1069 = vrot.lane.b32.xlu0 %v1032, 127
        %v1070 = vpop.permute.xlu0 %1069
        %v1071 = vsel %vm486, %v1068, %v1070
        %v1072 = vsel %vm486, %v1070, %v1068
        %v1073 = vmul.f32 %v1071, %v495
        %v1074 = vmul.f32 %v1072, %v499
        %1075 = vrot.lane.b32.xlu0 %v1030, 113
        %v1076 = vpop.permute.xlu0 %1075
        %1077 = vrot.lane.b32.xlu0 %v1032, 113
        %v1078 = vpop.permute.xlu0 %1077
        %v1079 = vsel %vm508, %v1076, %v1078
        %v1080 = vsel %vm508, %v1078, %v1076
        %v1081 = vmul.f32 %v1079, %v517
        %v1082 = vmul.f32 %v1080, %v521
        %1083 = vrot.lane.b32.xlu0 %v1030, 112
        %v1084 = vpop.permute.xlu0 %1083
        %1085 = vrot.lane.b32.xlu0 %v1032, 112
        %v1086 = vpop.permute.xlu0 %1085
        %v1087 = vsel %vm530, %v1084, %v1086
        %v1088 = vsel %vm530, %v1086, %v1084
        %v1089 = vmul.f32 %v1087, %v539
        %v1090 = vmul.f32 %v1088, %v543
        %1091 = vrot.lane.b32.xlu0 %v1030, 111
        %v1092 = vpop.permute.xlu0 %1091
        %1093 = vrot.lane.b32.xlu0 %v1032, 111
        %v1094 = vpop.permute.xlu0 %1093
        %v1095 = vsel %vm552, %v1092, %v1094
        %v1096 = vsel %vm552, %v1094, %v1092
        %v1097 = vmul.f32 %v1095, %v561
        %v1098 = vmul.f32 %v1096, %v565
        %1100 = vset.pattern.permute.xlu0 0
        %1101 = vperm.xlu0 %1100, %v1034
        %v1102 = vpop.permute.xlu0 %1101
        %v1104 = vmul.f32 %v1102, %v1041
        %v1105 = vmul.f32 %v1102, %v1042
        %1106 = vset.pattern.permute.xlu0 1
        %1107 = vperm.xlu0 %1106, %v1034
        %v1108 = vpop.permute.xlu0 %1107
        %v1110 = vmul.f32 %v1108, %v1049
        %v1111 = vmul.f32 %v1108, %v1050
        %v1112 = vadd.f32 %v1104, %v1110
        %v1113 = vadd.f32 %v1105, %v1111
        %1114 = vset.pattern.permute.xlu0 2
        %1115 = vperm.xlu0 %1114, %v1034
        %v1116 = vpop.permute.xlu0 %1115
        %v1118 = vmul.f32 %v1116, %v1057
        %v1119 = vmul.f32 %v1116, %v1058
        %v1120 = vadd.f32 %v1112, %v1118
        %v1121 = vadd.f32 %v1113, %v1119
        %1122 = vset.pattern.permute.xlu0 3
        %1123 = vperm.xlu0 %1122, %v1034
        %v1124 = vpop.permute.xlu0 %1123
        %v1126 = vmul.f32 %v1124, %v1065
        %v1127 = vmul.f32 %v1124, %v1066
        %1128 = vset.pattern.permute.xlu0 4
        %1129 = vperm.xlu0 %1128, %v1034
        %v1130 = vpop.permute.xlu0 %1129
        %v1132 = vmul.f32 %v1130, %v1030
        %v1133 = vmul.f32 %v1130, %v1032
        %v1134 = vadd.f32 %v1126, %v1132
        %v1135 = vadd.f32 %v1127, %v1133
        %1136 = vset.pattern.permute.xlu0 5
        %1137 = vperm.xlu0 %1136, %v1034
        %v1138 = vpop.permute.xlu0 %1137
        %v1140 = vmul.f32 %v1138, %v1073
        %v1141 = vmul.f32 %v1138, %v1074
        %v1142 = vadd.f32 %v1134, %v1140
        %v1143 = vadd.f32 %v1135, %v1141
        %1144 = vset.pattern.permute.xlu0 6
        %1145 = vperm.xlu0 %1144, %v1034
        %v1146 = vpop.permute.xlu0 %1145
        %v1148 = vmul.f32 %v1146, %v1081
        %v1149 = vmul.f32 %v1146, %v1082
        %1150 = vset.pattern.permute.xlu0 7
        %1151 = vperm.xlu0 %1150, %v1034
        %v1152 = vpop.permute.xlu0 %1151
        %v1154 = vmul.f32 %v1152, %v1089
        %v1155 = vmul.f32 %v1152, %v1090
        %v1156 = vadd.f32 %v1148, %v1154
        %v1157 = vadd.f32 %v1149, %v1155
        %1158 = vset.pattern.permute.xlu0 8
        %1159 = vperm.xlu0 %1158, %v1034
        %v1160 = vpop.permute.xlu0 %1159
        %v1162 = vmul.f32 %v1160, %v1097
        %v1163 = vmul.f32 %v1160, %v1098
        %v1164 = vadd.f32 %v1156, %v1162
        %v1165 = vadd.f32 %v1157, %v1163
        %v1166 = vadd.f32 %v1120, %v1142
        %v1167 = vadd.f32 %v1121, %v1143
        %v1168 = vld [vmem:[%s9] sm:$0xf]
        %1170 = vset.pattern.permute.xlu0 0
        %1171 = vperm.xlu0 %1170, %v1168
        %v1172 = vpop.permute.xlu0 %1171
        %v1174 = vadd.f32 %v1164, %v1172
        %v1175 = vadd.f32 %v1165, %v1172
        %v1176 = vadd.f32 %v1166, %v1174
        %v1177 = vadd.f32 %v1167, %v1175
        %v1178 = vadd.f32 %v1030, %v391
        %v1179 = vadd.f32 %v1032, %v392
        %v1180 = vmax.f32 %v1178, 0.0
        %v1181 = vmax.f32 %v1179, 0.0
        %v1184 = vrot.slane %v391, 4
        %v1185 = vrot.slane %v392, 4
        %v1188 = vadd.f32 %v1176, %v1184
        %v1189 = vadd.f32 %v1177, %v1185
        %v1190 = vmax.f32 %v1188, 0.0
        %v1191 = vmax.f32 %v1189, 0.0
        %v1194 = vrot.slane %v1190, 4
        %v1195 = vrot.slane %v1191, 4
        %v1198 = vsel %vm814, %v1180, %v1194
        %v1199 = vsel %vm814, %v1181, %v1195
        %1200 = vst [vmem:[%s390] sm:$0xff] %v1198
        %1201 = vst [vmem:[%s390 + $0x8] sm:$0xff] %v1199
        %s1202 = sand.u32 %s251, 1
        %s1203 = scalar_lea.sflag [#allocation4], %s1202
        %s1204 = sand.u32 %s251, 1
        %s1205 = smul.addr %s1204, 16
        %s1206 = scalar_lea.vmem [#allocation7], %s1205
        // Predicated region
        $region69: #{tpu_custom_call.1} parent=59 // pred_check
          %p1207 = pneg %p261
        $region70: #{tpu_custom_call.1} parent=59 // pred_check_branch
          %1209 = sbr.rel (%p1207) target = $region72
        $region71: #{tpu_custom_call.1} parent=59 // pred_region
          %s1211 = ssub.s32 256, 256
          %1212 = vsyncadd %s1203, %s1211
          %s1213 = smul.addr %s28, 2
          %s1214 = smul.addr %s1213, 128
          %s1215 = scalar_lea.hbm %s10, %s1214
          %s1217 = sshll.u32 %s1206, 4
          %s1218 = int_to_ptr.vmem [resolvable:$true] %s1217
          %1220 = dma.vmem_to_hbm [thread:$0]  %s1218, 256, %s1215, %s1203
        $region72: #{tpu_custom_call.1} parent=59 // pred_fallthru
          _
      $region60: #{tpu_custom_call.1} parent=5 // pred_fallthru
        _
      %p1221 = scmp.le.s32.totalorder 2, %s23
      // Predicated region
      $region73: #{tpu_custom_call.1} parent=5 // pred_check
        %p1222 = pneg %p1221
      $region74: #{tpu_custom_call.1} parent=5 // pred_check_branch
        %1224 = sbr.rel (%p1222) target = $region76
      $region75: #{tpu_custom_call.1} parent=5 // pred_region
        %s1225 = ssub.s32 %s23, 2
        // Predicated region
        $region77: #{tpu_custom_call.1} parent=75 // pred_check
          %p1226 = pneg %p267
        $region78: #{tpu_custom_call.1} parent=75 // pred_check_branch
          %1228 = sbr.rel (%p1226) target = $region80
        $region79: #{tpu_custom_call.1} parent=75 // pred_region
          %s1229 = sand.u32 %s252, 1
          %s1230 = scalar_lea.sflag [#allocation4], %s1229
          %s1231 = sand.u32 %s252, 1
          %s1232 = smul.addr %s1231, 16
          %s1233 = scalar_lea.vmem [#allocation7], %s1232
          %1234 = dma.done %s1230, 256
        $region80: #{tpu_custom_call.1} parent=75 // pred_fallthru
          _
      $region76: #{tpu_custom_call.1} parent=5 // pred_fallthru
        _
    $region6: #{tpu_custom_call.1} parent=1 // loop_footer
      %s27 = sadd.s32 1, %s23
    $region7: #{tpu_custom_call.1} parent=1 // loop_footer_branch
      %22 = sbr.rel target = $region3
    $region8: #{tpu_custom_call.1} parent=1 // loop_exit
      _
    %1235 = vsyncpa [#allocation3], 1
    %s1236 = scalar_lea.sflag [#allocation3], 1
    %1237 = vsyncpa %s1236, 1
    %1238 = vsyncpa [#allocation6], 1
    %1239 = vsyncpa [#allocation4], 1
    %s1240 = scalar_lea.sflag [#allocation4], 1
    %1241 = vsyncpa %s1240, 1

</llo_original>
